<compile_context>
chip_gen: v7x
topology: tpu7x:2x2x1
jax: 0.10.0
libtpu: 0.0.40
codegen_flags: <defaults>
</compile_context>

<pallas_src>
import math

import jax
import jax.numpy as jnp
from jax.experimental import pallas as pl
from jax.experimental.pallas import tpu as pltpu

# ----------------------------- module configuration -----------------------------
IN_CH = 4
OUT_CH = 8
KSIZE = (1, 4)            # kernel_size; k0 must be 1 (see note above)
STRIDE = 1
PADDING = (1, 2, 1, 2)    # F.pad order: (left, right, top, bottom)
GROUPS = 2
M_MIX = 4                 # m
B, H, W = 2, 16, 16       # batch / spatial size of the demo input

KK = KSIZE[0] * KSIZE[1]  # unfold window edge length (PyTorch unfolds with k0*k1)
K_WIN = KK * KK           # flattened attention window size

assert OUT_CH % GROUPS == 0
assert KSIZE[0] == 1, "PyTorch emb reshape requires kernel_size[0] == 1"
assert STRIDE == 1, "flat (col*OC) lane layout in the kernel assumes stride 1"

_PL, _PR, _PT, _PB = PADDING
HP = H + _PT + _PB                  # padded height (19)
WP = W + _PL + _PR                  # padded width  (19)
assert HP >= (H - 1) * STRIDE + KK and WP >= (W - 1) * STRIDE + KK

NGRP = 1 + 2 * KK                   # q | KK shifted k | KK shifted (pre-mixed) v
LW = W * OUT_CH                     # 128: lane width of every group / output slab
RP = ((HP + 7) // 8) * 8            # 24: sublane-padded row count of the slabs
XL = ((WP * IN_CH + 127) // 128) * 128   # 128: lane-padded input width


# ----------------------------- Pallas kernel -------------------------------------
def _stem_kernel(x_ref, w_ref, o_ref, qkv_ref):
    """Fused 1x1 convs + windowed attention for a block of BB batch elements.

    x_ref:   [BB, RP, XL]       zero-padded input, channels-last flattened lanes
    w_ref:   [XL, NGRP*LW]      pre-shifted block-diagonal fused projections
                                (q | k<<0..k<<KK-1 | v_0<<0..v_{KK-1}<<KK-1),
                                every group exactly LW = 128 lanes wide
    o_ref:   [BB, H, LW]        lane-dense output slab
    qkv_ref: [BB*RP, NGRP*LW]   VMEM scratch; every window slab is 128-lane aligned
    """
    bb = o_ref.shape[0]

    # All (1 + 2*KK) 1x1 convolutions of every batch element in ONE MXU matmul.
    # The pre-shifted block-diagonal weight makes every subsequent window slice
    # start at a lane offset that is a multiple of 128 (dense, unmasked loads),
    # and RP/XL/LW padding makes this store a full-tile unmasked store.
    x_flat = x_ref[...].reshape(bb * RP, XL)
    qkv_ref[...] = jnp.dot(x_flat, w_ref[...], preferred_element_type=jnp.float32)

    for b in range(bb):                       # static unroll (BB is tiny)
        base = b * RP                         # multiple of 8 -> tile-aligned rows

        # q on the *unpadded* image (the centre-column shift is baked into group 0).
        q = qkv_ref[pl.ds(base + _PT, H), pl.ds(0, LW)]                 # [H, 128]

        # ---- pass 1: separable upper bound  mx >= max_window (q*k) -------------
        # Column max over the KK pre-shifted k groups (KK full-slab aligned loads),
        # then row max over the KK sublane offsets; no q*k products needed.
        # q*k <= |q| * max_window|k|, so exp arguments stay <= 0 (stable), and
        # softmax shift-invariance keeps the result exact.
        cmax = jnp.abs(qkv_ref[pl.ds(base, RP), pl.ds(LW, LW)])         # [RP, 128]
        for bp in range(1, KK):
            cmax = jnp.maximum(
                cmax, jnp.abs(qkv_ref[pl.ds(base, RP), pl.ds((1 + bp) * LW, LW)]))
        rmax = cmax[0:H]
        for a in range(1, KK):
            rmax = jnp.maximum(rmax, cmax[a:a + H])
        mx = jnp.abs(q) * rmax                                          # [H, 128]

        # ---- pass 2: exp-sum (den) + value-weighted sum (num), one normalise ---
        num = jnp.zeros((H, LW), dtype=jnp.float32)
        den = jnp.zeros((H, LW), dtype=jnp.float32)
        for a in range(KK):                  # window-row offset (sublane offset)
            for bp in range(KK):             # window-col offset (baked into lanes)
                k_win = qkv_ref[pl.ds(base + a, H), pl.ds((1 + bp) * LW, LW)]
                v_win = qkv_ref[pl.ds(base + a, H),
                                pl.ds((1 + KK + bp) * LW, LW)]
                p = jnp.exp(q * k_win - mx)
                num = num + p * v_win
                den = den + p

        # EUP approximate reciprocal + one Newton step: moves the divide off the
        # busy VPU path while keeping ~f32 accuracy for the self-check.
        r = pl.reciprocal(den, approx=True)
        r = r * (2.0 - den * r)
        o_ref[b] = num * r


# ----------------------------- fused weights -------------------------------------
def _fused_weights(params):
    """Fold the emb mixture into the value convs and build the pre-shifted
    block-diagonal projection matrix [XL, NGRP*LW] consumed by the kernel.

    Column layout (each group exactly LW = W*OC = 128 lanes, so every slice in
    the kernel is 128-lane aligned):
        group 0        : q   at padded column  j + _PL   (the unpadded image)
        group 1+bp     : k   at padded column  j + bp    (bp = 0..KK-1)
        group 1+KK+bp  : v_bp at padded column j + bp    (emb-premixed value conv)
    """
    wq, wk, wv = params["wq"], params["wk"], params["wv"]
    emb_a, emb_b, emb_mix = params["emb_a"], params["emb_b"], params["emb_mix"]

    # Mixture weights (tiny m x kk tensor): params-only plain-JAX glue.
    la = jnp.einsum("mc,cba->mba", emb_mix, emb_a)
    lb = jnp.einsum("mc,cba->mba", emb_mix, emb_b)
    emb = la[:, :, None, :] + lb[:, None, :, :]                    # [m, k0, k0, k1]
    emb_w = jax.nn.softmax(emb.reshape(M_MIX, -1), axis=0).reshape(M_MIX, KK)

    # Pre-mixed value projections: wvmix[bp] = sum_m emb_w[m, bp] * wv[m]
    wvmix = jnp.einsum("mb,moc->boc", emb_w, wv)                   # [KK, OC, Cin]

    rows = jnp.arange(WP)[:, None]
    cols = jnp.arange(W)[None, :]

    def shifted_block(w_single, shift):
        # sel[pcol, j] = 1  iff  padded column pcol == output column j + shift
        sel = (rows == cols + shift).astype(jnp.float32)           # [WP, W]
        blk = jnp.einsum("pj,oc->pcjo", sel, w_single)             # [WP, Cin, W, OC]
        return blk.reshape(WP * IN_CH, LW)

    blocks = [shifted_block(wq, _PL)]
    blocks += [shifted_block(wk, bp) for bp in range(KK)]
    blocks += [shifted_block(wvmix[bp], bp) for bp in range(KK)]
    w_all = jnp.concatenate(blocks, axis=1)                        # [WP*Cin, NGRP*LW]
    # Pad the contraction dim to the lane-padded input width (zero rows).
    return jnp.pad(w_all, ((0, XL - WP * IN_CH), (0, 0)))          # [XL, NGRP*LW]


# ----------------------------- batch-block selection ------------------------------
def _pick_batch_block(batch):
    """v7x has 2 TensorCores/chip -> keep a batch-parallel grid (one element per
    step) so independent batch elements shard across cores.  Single-TC v5e/v6e ->
    collapse the whole batch into one grid step (per-step overhead ~0.35us would
    otherwise dominate this sub-microsecond step)."""
    try:
        kind = jax.devices()[0].device_kind.lower()
    except Exception:
        kind = ""
    if "7" in kind and batch > 1:
        return 1
    return batch


# ----------------------------- forward wrapper -----------------------------------
def attention_stem_forward(x, params):
    """x: [B, Cin, H, W] (NCHW, float32). Returns [B, OUT_CH, H, W]."""
    b_, c_, h_, w_ = x.shape
    assert (c_, h_, w_) == (IN_CH, H, W)

    xp = jnp.pad(x, ((0, 0), (0, 0), (_PT, _PB), (_PL, _PR)))      # NCHW padded
    x2d = jnp.transpose(xp, (0, 2, 3, 1)).astype(jnp.float32)      # [B, Hp, Wp, Cin]
    x2d = x2d.reshape(b_, HP, WP * IN_CH)                          # flat lane layout
    # Pad rows to a multiple of 8 and lanes to a multiple of 128 -> dense DMA/loads.
    x2d = jnp.pad(x2d, ((0, 0), (0, RP - HP), (0, XL - WP * IN_CH)))

    w_all = _fused_weights(params)                                 # [XL, NGRP*LW]

    bb = _pick_batch_block(b_)
    grid = (b_ // bb,)

    out2d = pl.pallas_call(
        _stem_kernel,
        out_shape=jax.ShapeDtypeStruct((b_, H, LW), jnp.float32),
        grid=grid,
        in_specs=[
            pl.BlockSpec((bb, RP, XL), lambda i: (i, 0, 0)),           # input slab
            pl.BlockSpec((XL, NGRP * LW), lambda i: (0, 0)),           # fused weights
        ],
        out_specs=pl.BlockSpec((bb, H, LW), lambda i: (i, 0, 0)),
        scratch_shapes=[pltpu.VMEM((bb * RP, NGRP * LW), jnp.float32)],
        compiler_params=pltpu.CompilerParams(
            dimension_semantics=("parallel",)),   # batch steps independent
    )(x2d, w_all)

    # TODO(synk): for production stem sizes replace the O(Wp^2) block-diagonal
    # weight with a per-pixel [Cin, NGRP*OC] projection plus a row-halo grid axis
    # so weights/scratch stay image-width independent (needed for v7x's 64 MiB VMEM).

    out = out2d.reshape(b_, H, W, OUT_CH)
    return jnp.transpose(out, (0, 3, 1, 2))                        # NCHW


# ----------------------------- pure-JAX reference --------------------------------
def reference_forward(x, params):
    wq, wk, wv = params["wq"], params["wk"], params["wv"]
    emb_a, emb_b, emb_mix = params["emb_a"], params["emb_b"], params["emb_mix"]
    b_, _, h_, w_ = x.shape
    xp = jnp.pad(x, ((0, 0), (0, 0), (_PT, _PB), (_PL, _PR)))

    q = jnp.einsum("oc,bchw->bohw", wq, x)
    k = jnp.einsum("oc,bchw->bohw", wk, xp)
    v = jnp.einsum("moc,bchw->mbohw", wv, xp)

    def unfold(t):  # [..., Hp, Wp] -> [..., H, W, KK, KK]
        outer = []
        for a in range(KK):
            row = t[..., a:a + (h_ - 1) * STRIDE + 1:STRIDE, :]
            cols = [row[..., bp:bp + (w_ - 1) * STRIDE + 1:STRIDE] for bp in range(KK)]
            outer.append(jnp.stack(cols, axis=-1))
        return jnp.stack(outer, axis=-2)

    k_win = unfold(k)                               # [B, OC, H, W, KK, KK]
    v_win = unfold(v)                               # [m, B, OC, H, W, KK, KK]

    la = jnp.einsum("mc,cba->mba", emb_mix, emb_a)
    lb = jnp.einsum("mc,cba->mba", emb_mix, emb_b)
    emb = la[:, :, None, :] + lb[:, None, :, :]
    emb_w = jax.nn.softmax(emb.reshape(M_MIX, -1), axis=0).reshape(M_MIX, 1, 1, 1, 1, 1, KK)

    v_mixed = jnp.sum(emb_w * v_win, axis=0).reshape(b_, OUT_CH, h_, w_, K_WIN)
    logits = q[..., None] * k_win.reshape(b_, OUT_CH, h_, w_, K_WIN)
    att = jax.nn.softmax(logits, axis=-1)
    return jnp.sum(att * v_mixed, axis=-1)          # [B, OC, H, W]


# ----------------------------- demo / self-check ---------------------------------
if __name__ == "__main__":
    key = jax.random.PRNGKey(0)
    ks = jax.random.split(key, 7)
    std = math.sqrt(2.0 / OUT_CH)  # kaiming_normal_(fan_out, relu) for 1x1 convs
    params = {
        "wq": std * jax.random.normal(ks[0], (OUT_CH, IN_CH), jnp.float32),
        "wk": std * jax.random.normal(ks[1], (OUT_CH, IN_CH), jnp.float32),
        "wv": std * jax.random.normal(ks[2], (M_MIX, OUT_CH, IN_CH), jnp.float32),
        "emb_a": jax.random.normal(ks[3], (OUT_CH // GROUPS, KSIZE[0], KSIZE[1]), jnp.float32),
        "emb_b": jax.random.normal(ks[4], (OUT_CH // GROUPS, KSIZE[0], KSIZE[1]), jnp.float32),
        "emb_mix": jax.random.normal(ks[5], (M_MIX, OUT_CH // GROUPS), jnp.float32),
    }
    x = jax.random.normal(ks[6], (B, IN_CH, H, W), jnp.float32)

    out = jax.block_until_ready(attention_stem_forward(x, params))

    ref = reference_forward(x, params)
    err = float(jnp.max(jnp.abs(out - ref)))
    # 1e-3 tolerance: approximate-reciprocal + Newton path and the shifted softmax
    # bound keep the error ~1e-5 in practice; keep margin for transcendental paths.
    if not (out.shape == (B, OUT_CH, H, W) and err < 1e-3):
        raise AssertionError(f"mismatch: shape={out.shape}, max_abs_err={err}")
    print("KERNEL_OK")
</pallas_src>

<mosaic_0001>
module attributes {stable_mosaic.version = 11 : i64} {
  func.func @_stem_kernel(%arg0: i32, %arg1: memref<2x24x128xf32, #tpu.memory_space<vmem>>, %arg2: memref<128x1152xf32, #tpu.memory_space<vmem>>, %arg3: memref<2x16x128xf32, #tpu.memory_space<vmem>>, %arg4: memref<48x1152xf32, #tpu.memory_space<vmem>>) attributes {dimension_semantics = [#tpu.dimension_semantics<parallel>], iteration_bounds = array<i64: 1>, scalar_prefetch = 0 : i64, scratch_operands = 1 : i64, tpu.core_type = #tpu.core_type<tc>, window_params = [{transform_indices = @transform_0, window_bounds = array<i64: 2, 24, 128>}, {pipeline_mode = #tpu.pipeline_mode<synchronous>, transform_indices = @transform_1, window_bounds = array<i64: 128, 1152>}, {transform_indices = @transform_2, window_bounds = array<i64: 2, 16, 128>}]} {
    %c0 = arith.constant 0 : index
    %c0_0 = arith.constant 0 : index
    %c0_1 = arith.constant 0 : index
    %0 = vector.load %arg1[%c0, %c0_0, %c0_1] : memref<2x24x128xf32, #tpu.memory_space<vmem>>, vector<2x24x128xf32>
    %1 = vector.shape_cast %0 : vector<2x24x128xf32> to vector<48x128xf32>
    %c0_2 = arith.constant 0 : index
    %c0_3 = arith.constant 0 : index
    %2 = vector.load %arg2[%c0_2, %c0_3] : memref<128x1152xf32, #tpu.memory_space<vmem>>, vector<128x1152xf32>
    %cst = arith.constant dense<0.000000e+00> : vector<48x1152xf32>
    %3 = tpu.matmul %1, %2, %cst {dimension_numbers = #tpu.dot_dimension_numbers<[1], [0], [0], [1], [0, 0, 1, 1], [], []>} : vector<48x128xf32>, vector<128x1152xf32>, vector<48x1152xf32> -> vector<48x1152xf32>
    %c0_4 = arith.constant 0 : index
    %c0_5 = arith.constant 0 : index
    %4 = vector.load %arg4[%c0_4, %c0_5] : memref<48x1152xf32, #tpu.memory_space<vmem>>, vector<48x1152xf32>
    tpu.vector_store %arg4[%c0_4, %c0_5], %3 {strides = array<i32>} : memref<48x1152xf32, #tpu.memory_space<vmem>>, vector<48x1152xf32>,
    %c1 = arith.constant 1 : index
    %c0_6 = arith.constant 0 : index
    %5 = vector.load %arg4[%c1, %c0_6] : memref<48x1152xf32, #tpu.memory_space<vmem>>, vector<16x128xf32>
    %c0_7 = arith.constant 0 : index
    %c128 = arith.constant 128 : index
    %6 = vector.load %arg4[%c0_7, %c128] : memref<48x1152xf32, #tpu.memory_space<vmem>>, vector<24x128xf32>
    %7 = math.absf %6 : vector<24x128xf32>
    %c0_8 = arith.constant 0 : index
    %c256 = arith.constant 256 : index
    %8 = vector.load %arg4[%c0_8, %c256] : memref<48x1152xf32, #tpu.memory_space<vmem>>, vector<24x128xf32>
    %9 = math.absf %8 : vector<24x128xf32>
    %10 = arith.maximumf %7, %9 : vector<24x128xf32>
    %c0_9 = arith.constant 0 : index
    %c384 = arith.constant 384 : index
    %11 = vector.load %arg4[%c0_9, %c384] : memref<48x1152xf32, #tpu.memory_space<vmem>>, vector<24x128xf32>
    %12 = math.absf %11 : vector<24x128xf32>
    %13 = arith.maximumf %10, %12 : vector<24x128xf32>
    %c0_10 = arith.constant 0 : index
    %c512 = arith.constant 512 : index
    %14 = vector.load %arg4[%c0_10, %c512] : memref<48x1152xf32, #tpu.memory_space<vmem>>, vector<24x128xf32>
    %15 = math.absf %14 : vector<24x128xf32>
    %16 = arith.maximumf %13, %15 : vector<24x128xf32>
    %17 = vector.extract_strided_slice %16 {offsets = [0, 0], sizes = [16, 128], strides = [1, 1]} : vector<24x128xf32> to vector<16x128xf32>
    %18 = vector.extract_strided_slice %16 {offsets = [1, 0], sizes = [16, 128], strides = [1, 1]} : vector<24x128xf32> to vector<16x128xf32>
    %19 = arith.maximumf %17, %18 : vector<16x128xf32>
    %20 = vector.extract_strided_slice %16 {offsets = [2, 0], sizes = [16, 128], strides = [1, 1]} : vector<24x128xf32> to vector<16x128xf32>
    %21 = arith.maximumf %19, %20 : vector<16x128xf32>
    %22 = vector.extract_strided_slice %16 {offsets = [3, 0], sizes = [16, 128], strides = [1, 1]} : vector<24x128xf32> to vector<16x128xf32>
    %23 = arith.maximumf %21, %22 : vector<16x128xf32>
    %24 = math.absf %5 : vector<16x128xf32>
    %25 = arith.mulf %24, %23 : vector<16x128xf32>
    %cst_11 = arith.constant 0.000000e+00 : f32
    %26 = vector.broadcast %cst_11 : f32 to vector<16x128xf32>
    %cst_12 = arith.constant 0.000000e+00 : f32
    %27 = vector.broadcast %cst_12 : f32 to vector<16x128xf32>
    %c0_13 = arith.constant 0 : index
    %c128_14 = arith.constant 128 : index
    %28 = vector.load %arg4[%c0_13, %c128_14] : memref<48x1152xf32, #tpu.memory_space<vmem>>, vector<16x128xf32>
    %c0_15 = arith.constant 0 : index
    %c640 = arith.constant 640 : index
    %29 = vector.load %arg4[%c0_15, %c640] : memref<48x1152xf32, #tpu.memory_space<vmem>>, vector<16x128xf32>
    %30 = arith.mulf %5, %28 : vector<16x128xf32>
    %31 = arith.subf %30, %25 : vector<16x128xf32>
    %32 = math.exp %31 : vector<16x128xf32>
    %33 = arith.mulf %32, %29 : vector<16x128xf32>
    %34 = arith.addf %26, %33 : vector<16x128xf32>
    %35 = arith.addf %27, %32 : vector<16x128xf32>
    %c0_16 = arith.constant 0 : index
    %c256_17 = arith.constant 256 : index
    %36 = vector.load %arg4[%c0_16, %c256_17] : memref<48x1152xf32, #tpu.memory_space<vmem>>, vector<16x128xf32>
    %c0_18 = arith.constant 0 : index
    %c768 = arith.constant 768 : index
    %37 = vector.load %arg4[%c0_18, %c768] : memref<48x1152xf32, #tpu.memory_space<vmem>>, vector<16x128xf32>
    %38 = arith.mulf %5, %36 : vector<16x128xf32>
    %39 = arith.subf %38, %25 : vector<16x128xf32>
    %40 = math.exp %39 : vector<16x128xf32>
    %41 = arith.mulf %40, %37 : vector<16x128xf32>
    %42 = arith.addf %34, %41 : vector<16x128xf32>
    %43 = arith.addf %35, %40 : vector<16x128xf32>
    %c0_19 = arith.constant 0 : index
    %c384_20 = arith.constant 384 : index
    %44 = vector.load %arg4[%c0_19, %c384_20] : memref<48x1152xf32, #tpu.memory_space<vmem>>, vector<16x128xf32>
    %c0_21 = arith.constant 0 : index
    %c896 = arith.constant 896 : index
    %45 = vector.load %arg4[%c0_21, %c896] : memref<48x1152xf32, #tpu.memory_space<vmem>>, vector<16x128xf32>
    %46 = arith.mulf %5, %44 : vector<16x128xf32>
    %47 = arith.subf %46, %25 : vector<16x128xf32>
    %48 = math.exp %47 : vector<16x128xf32>
    %49 = arith.mulf %48, %45 : vector<16x128xf32>
    %50 = arith.addf %42, %49 : vector<16x128xf32>
    %51 = arith.addf %43, %48 : vector<16x128xf32>
    %c0_22 = arith.constant 0 : index
    %c512_23 = arith.constant 512 : index
    %52 = vector.load %arg4[%c0_22, %c512_23] : memref<48x1152xf32, #tpu.memory_space<vmem>>, vector<16x128xf32>
    %c0_24 = arith.constant 0 : index
    %c1024 = arith.constant 1024 : index
    %53 = vector.load %arg4[%c0_24, %c1024] : memref<48x1152xf32, #tpu.memory_space<vmem>>, vector<16x128xf32>
    %54 = arith.mulf %5, %52 : vector<16x128xf32>
    %55 = arith.subf %54, %25 : vector<16x128xf32>
    %56 = math.exp %55 : vector<16x128xf32>
    %57 = arith.mulf %56, %53 : vector<16x128xf32>
    %58 = arith.addf %50, %57 : vector<16x128xf32>
    %59 = arith.addf %51, %56 : vector<16x128xf32>
    %c1_25 = arith.constant 1 : index
    %c128_26 = arith.constant 128 : index
    %60 = vector.load %arg4[%c1_25, %c128_26] : memref<48x1152xf32, #tpu.memory_space<vmem>>, vector<16x128xf32>
    %c1_27 = arith.constant 1 : index
    %c640_28 = arith.constant 640 : index
    %61 = vector.load %arg4[%c1_27, %c640_28] : memref<48x1152xf32, #tpu.memory_space<vmem>>, vector<16x128xf32>
    %62 = arith.mulf %5, %60 : vector<16x128xf32>
    %63 = arith.subf %62, %25 : vector<16x128xf32>
    %64 = math.exp %63 : vector<16x128xf32>
    %65 = arith.mulf %64, %61 : vector<16x128xf32>
    %66 = arith.addf %58, %65 : vector<16x128xf32>
    %67 = arith.addf %59, %64 : vector<16x128xf32>
    %c1_29 = arith.constant 1 : index
    %c256_30 = arith.constant 256 : index
    %68 = vector.load %arg4[%c1_29, %c256_30] : memref<48x1152xf32, #tpu.memory_space<vmem>>, vector<16x128xf32>
    %c1_31 = arith.constant 1 : index
    %c768_32 = arith.constant 768 : index
    %69 = vector.load %arg4[%c1_31, %c768_32] : memref<48x1152xf32, #tpu.memory_space<vmem>>, vector<16x128xf32>
    %70 = arith.mulf %5, %68 : vector<16x128xf32>
    %71 = arith.subf %70, %25 : vector<16x128xf32>
    %72 = math.exp %71 : vector<16x128xf32>
    %73 = arith.mulf %72, %69 : vector<16x128xf32>
    %74 = arith.addf %66, %73 : vector<16x128xf32>
    %75 = arith.addf %67, %72 : vector<16x128xf32>
    %c1_33 = arith.constant 1 : index
    %c384_34 = arith.constant 384 : index
    %76 = vector.load %arg4[%c1_33, %c384_34] : memref<48x1152xf32, #tpu.memory_space<vmem>>, vector<16x128xf32>
    %c1_35 = arith.constant 1 : index
    %c896_36 = arith.constant 896 : index
    %77 = vector.load %arg4[%c1_35, %c896_36] : memref<48x1152xf32, #tpu.memory_space<vmem>>, vector<16x128xf32>
    %78 = arith.mulf %5, %76 : vector<16x128xf32>
    %79 = arith.subf %78, %25 : vector<16x128xf32>
    %80 = math.exp %79 : vector<16x128xf32>
    %81 = arith.mulf %80, %77 : vector<16x128xf32>
    %82 = arith.addf %74, %81 : vector<16x128xf32>
    %83 = arith.addf %75, %80 : vector<16x128xf32>
    %c1_37 = arith.constant 1 : index
    %c512_38 = arith.constant 512 : index
    %84 = vector.load %arg4[%c1_37, %c512_38] : memref<48x1152xf32, #tpu.memory_space<vmem>>, vector<16x128xf32>
    %c1_39 = arith.constant 1 : index
    %c1024_40 = arith.constant 1024 : index
    %85 = vector.load %arg4[%c1_39, %c1024_40] : memref<48x1152xf32, #tpu.memory_space<vmem>>, vector<16x128xf32>
    %86 = arith.mulf %5, %84 : vector<16x128xf32>
    %87 = arith.subf %86, %25 : vector<16x128xf32>
    %88 = math.exp %87 : vector<16x128xf32>
    %89 = arith.mulf %88, %85 : vector<16x128xf32>
    %90 = arith.addf %82, %89 : vector<16x128xf32>
    %91 = arith.addf %83, %88 : vector<16x128xf32>
    %c2 = arith.constant 2 : index
    %c128_41 = arith.constant 128 : index
    %92 = vector.load %arg4[%c2, %c128_41] : memref<48x1152xf32, #tpu.memory_space<vmem>>, vector<16x128xf32>
    %c2_42 = arith.constant 2 : index
    %c640_43 = arith.constant 640 : index
    %93 = vector.load %arg4[%c2_42, %c640_43] : memref<48x1152xf32, #tpu.memory_space<vmem>>, vector<16x128xf32>
    %94 = arith.mulf %5, %92 : vector<16x128xf32>
    %95 = arith.subf %94, %25 : vector<16x128xf32>
    %96 = math.exp %95 : vector<16x128xf32>
    %97 = arith.mulf %96, %93 : vector<16x128xf32>
    %98 = arith.addf %90, %97 : vector<16x128xf32>
    %99 = arith.addf %91, %96 : vector<16x128xf32>
    %c2_44 = arith.constant 2 : index
    %c256_45 = arith.constant 256 : index
    %100 = vector.load %arg4[%c2_44, %c256_45] : memref<48x1152xf32, #tpu.memory_space<vmem>>, vector<16x128xf32>
    %c2_46 = arith.constant 2 : index
    %c768_47 = arith.constant 768 : index
    %101 = vector.load %arg4[%c2_46, %c768_47] : memref<48x1152xf32, #tpu.memory_space<vmem>>, vector<16x128xf32>
    %102 = arith.mulf %5, %100 : vector<16x128xf32>
    %103 = arith.subf %102, %25 : vector<16x128xf32>
    %104 = math.exp %103 : vector<16x128xf32>
    %105 = arith.mulf %104, %101 : vector<16x128xf32>
    %106 = arith.addf %98, %105 : vector<16x128xf32>
    %107 = arith.addf %99, %104 : vector<16x128xf32>
    %c2_48 = arith.constant 2 : index
    %c384_49 = arith.constant 384 : index
    %108 = vector.load %arg4[%c2_48, %c384_49] : memref<48x1152xf32, #tpu.memory_space<vmem>>, vector<16x128xf32>
    %c2_50 = arith.constant 2 : index
    %c896_51 = arith.constant 896 : index
    %109 = vector.load %arg4[%c2_50, %c896_51] : memref<48x1152xf32, #tpu.memory_space<vmem>>, vector<16x128xf32>
    %110 = arith.mulf %5, %108 : vector<16x128xf32>
    %111 = arith.subf %110, %25 : vector<16x128xf32>
    %112 = math.exp %111 : vector<16x128xf32>
    %113 = arith.mulf %112, %109 : vector<16x128xf32>
    %114 = arith.addf %106, %113 : vector<16x128xf32>
    %115 = arith.addf %107, %112 : vector<16x128xf32>
    %c2_52 = arith.constant 2 : index
    %c512_53 = arith.constant 512 : index
    %116 = vector.load %arg4[%c2_52, %c512_53] : memref<48x1152xf32, #tpu.memory_space<vmem>>, vector<16x128xf32>
    %c2_54 = arith.constant 2 : index
    %c1024_55 = arith.constant 1024 : index
    %117 = vector.load %arg4[%c2_54, %c1024_55] : memref<48x1152xf32, #tpu.memory_space<vmem>>, vector<16x128xf32>
    %118 = arith.mulf %5, %116 : vector<16x128xf32>
    %119 = arith.subf %118, %25 : vector<16x128xf32>
    %120 = math.exp %119 : vector<16x128xf32>
    %121 = arith.mulf %120, %117 : vector<16x128xf32>
    %122 = arith.addf %114, %121 : vector<16x128xf32>
    %123 = arith.addf %115, %120 : vector<16x128xf32>
    %c3 = arith.constant 3 : index
    %c128_56 = arith.constant 128 : index
    %124 = vector.load %arg4[%c3, %c128_56] : memref<48x1152xf32, #tpu.memory_space<vmem>>, vector<16x128xf32>
    %c3_57 = arith.constant 3 : index
    %c640_58 = arith.constant 640 : index
    %125 = vector.load %arg4[%c3_57, %c640_58] : memref<48x1152xf32, #tpu.memory_space<vmem>>, vector<16x128xf32>
    %126 = arith.mulf %5, %124 : vector<16x128xf32>
    %127 = arith.subf %126, %25 : vector<16x128xf32>
    %128 = math.exp %127 : vector<16x128xf32>
    %129 = arith.mulf %128, %125 : vector<16x128xf32>
    %130 = arith.addf %122, %129 : vector<16x128xf32>
    %131 = arith.addf %123, %128 : vector<16x128xf32>
    %c3_59 = arith.constant 3 : index
    %c256_60 = arith.constant 256 : index
    %132 = vector.load %arg4[%c3_59, %c256_60] : memref<48x1152xf32, #tpu.memory_space<vmem>>, vector<16x128xf32>
    %c3_61 = arith.constant 3 : index
    %c768_62 = arith.constant 768 : index
    %133 = vector.load %arg4[%c3_61, %c768_62] : memref<48x1152xf32, #tpu.memory_space<vmem>>, vector<16x128xf32>
    %134 = arith.mulf %5, %132 : vector<16x128xf32>
    %135 = arith.subf %134, %25 : vector<16x128xf32>
    %136 = math.exp %135 : vector<16x128xf32>
    %137 = arith.mulf %136, %133 : vector<16x128xf32>
    %138 = arith.addf %130, %137 : vector<16x128xf32>
    %139 = arith.addf %131, %136 : vector<16x128xf32>
    %c3_63 = arith.constant 3 : index
    %c384_64 = arith.constant 384 : index
    %140 = vector.load %arg4[%c3_63, %c384_64] : memref<48x1152xf32, #tpu.memory_space<vmem>>, vector<16x128xf32>
    %c3_65 = arith.constant 3 : index
    %c896_66 = arith.constant 896 : index
    %141 = vector.load %arg4[%c3_65, %c896_66] : memref<48x1152xf32, #tpu.memory_space<vmem>>, vector<16x128xf32>
    %142 = arith.mulf %5, %140 : vector<16x128xf32>
    %143 = arith.subf %142, %25 : vector<16x128xf32>
    %144 = math.exp %143 : vector<16x128xf32>
    %145 = arith.mulf %144, %141 : vector<16x128xf32>
    %146 = arith.addf %138, %145 : vector<16x128xf32>
    %147 = arith.addf %139, %144 : vector<16x128xf32>
    %c3_67 = arith.constant 3 : index
    %c512_68 = arith.constant 512 : index
    %148 = vector.load %arg4[%c3_67, %c512_68] : memref<48x1152xf32, #tpu.memory_space<vmem>>, vector<16x128xf32>
    %c3_69 = arith.constant 3 : index
    %c1024_70 = arith.constant 1024 : index
    %149 = vector.load %arg4[%c3_69, %c1024_70] : memref<48x1152xf32, #tpu.memory_space<vmem>>, vector<16x128xf32>
    %150 = arith.mulf %5, %148 : vector<16x128xf32>
    %151 = arith.subf %150, %25 : vector<16x128xf32>
    %152 = math.exp %151 : vector<16x128xf32>
    %153 = arith.mulf %152, %149 : vector<16x128xf32>
    %154 = arith.addf %146, %153 : vector<16x128xf32>
    %155 = arith.addf %147, %152 : vector<16x128xf32>
    %156 = tpu.reciprocal %155 {approx = true} : vector<16x128xf32> -> vector<16x128xf32>
    %157 = arith.mulf %155, %156 : vector<16x128xf32>
    %cst_71 = arith.constant 2.000000e+00 : f32
    %158 = vector.broadcast %cst_71 : f32 to vector<16x128xf32>
    %159 = arith.subf %158, %157 : vector<16x128xf32>
    %160 = arith.mulf %156, %159 : vector<16x128xf32>
    %161 = arith.mulf %154, %160 : vector<16x128xf32>
    %c0_72 = arith.constant 0 : index
    %c0_73 = arith.constant 0 : index
    %c0_74 = arith.constant 0 : index
    %162 = vector.load %arg3[%c0_72, %c0_73, %c0_74] : memref<2x16x128xf32, #tpu.memory_space<vmem>>, vector<1x16x128xf32>
    %163 = vector.shape_cast %162 : vector<1x16x128xf32> to vector<16x128xf32>
    %164 = vector.shape_cast %161 : vector<16x128xf32> to vector<1x16x128xf32>
    tpu.vector_store %arg3[%c0_72, %c0_73, %c0_74], %164 {strides = array<i32>} : memref<2x16x128xf32, #tpu.memory_space<vmem>>, vector<1x16x128xf32>,
    %c25 = arith.constant 25 : index
    %c0_75 = arith.constant 0 : index
    %165 = vector.load %arg4[%c25, %c0_75] : memref<48x1152xf32, #tpu.memory_space<vmem>>, vector<16x128xf32>
    %c24 = arith.constant 24 : index
    %c128_76 = arith.constant 128 : index
    %166 = vector.load %arg4[%c24, %c128_76] : memref<48x1152xf32, #tpu.memory_space<vmem>>, vector<24x128xf32>
    %167 = math.absf %166 : vector<24x128xf32>
    %c24_77 = arith.constant 24 : index
    %c256_78 = arith.constant 256 : index
    %168 = vector.load %arg4[%c24_77, %c256_78] : memref<48x1152xf32, #tpu.memory_space<vmem>>, vector<24x128xf32>
    %169 = math.absf %168 : vector<24x128xf32>
    %170 = arith.maximumf %167, %169 : vector<24x128xf32>
    %c24_79 = arith.constant 24 : index
    %c384_80 = arith.constant 384 : index
    %171 = vector.load %arg4[%c24_79, %c384_80] : memref<48x1152xf32, #tpu.memory_space<vmem>>, vector<24x128xf32>
    %172 = math.absf %171 : vector<24x128xf32>
    %173 = arith.maximumf %170, %172 : vector<24x128xf32>
    %c24_81 = arith.constant 24 : index
    %c512_82 = arith.constant 512 : index
    %174 = vector.load %arg4[%c24_81, %c512_82] : memref<48x1152xf32, #tpu.memory_space<vmem>>, vector<24x128xf32>
    %175 = math.absf %174 : vector<24x128xf32>
    %176 = arith.maximumf %173, %175 : vector<24x128xf32>
    %177 = vector.extract_strided_slice %176 {offsets = [0, 0], sizes = [16, 128], strides = [1, 1]} : vector<24x128xf32> to vector<16x128xf32>
    %178 = vector.extract_strided_slice %176 {offsets = [1, 0], sizes = [16, 128], strides = [1, 1]} : vector<24x128xf32> to vector<16x128xf32>
    %179 = arith.maximumf %177, %178 : vector<16x128xf32>
    %180 = vector.extract_strided_slice %176 {offsets = [2, 0], sizes = [16, 128], strides = [1, 1]} : vector<24x128xf32> to vector<16x128xf32>
    %181 = arith.maximumf %179, %180 : vector<16x128xf32>
    %182 = vector.extract_strided_slice %176 {offsets = [3, 0], sizes = [16, 128], strides = [1, 1]} : vector<24x128xf32> to vector<16x128xf32>
    %183 = arith.maximumf %181, %182 : vector<16x128xf32>
    %184 = math.absf %165 : vector<16x128xf32>
    %185 = arith.mulf %184, %183 : vector<16x128xf32>
    %cst_83 = arith.constant 0.000000e+00 : f32
    %186 = vector.broadcast %cst_83 : f32 to vector<16x128xf32>
    %cst_84 = arith.constant 0.000000e+00 : f32
    %187 = vector.broadcast %cst_84 : f32 to vector<16x128xf32>
    %c24_85 = arith.constant 24 : index
    %c128_86 = arith.constant 128 : index
    %188 = vector.load %arg4[%c24_85, %c128_86] : memref<48x1152xf32, #tpu.memory_space<vmem>>, vector<16x128xf32>
    %c24_87 = arith.constant 24 : index
    %c640_88 = arith.constant 640 : index
    %189 = vector.load %arg4[%c24_87, %c640_88] : memref<48x1152xf32, #tpu.memory_space<vmem>>, vector<16x128xf32>
    %190 = arith.mulf %165, %188 : vector<16x128xf32>
    %191 = arith.subf %190, %185 : vector<16x128xf32>
    %192 = math.exp %191 : vector<16x128xf32>
    %193 = arith.mulf %192, %189 : vector<16x128xf32>
    %194 = arith.addf %186, %193 : vector<16x128xf32>
    %195 = arith.addf %187, %192 : vector<16x128xf32>
    %c24_89 = arith.constant 24 : index
    %c256_90 = arith.constant 256 : index
    %196 = vector.load %arg4[%c24_89, %c256_90] : memref<48x1152xf32, #tpu.memory_space<vmem>>, vector<16x128xf32>
    %c24_91 = arith.constant 24 : index
    %c768_92 = arith.constant 768 : index
    %197 = vector.load %arg4[%c24_91, %c768_92] : memref<48x1152xf32, #tpu.memory_space<vmem>>, vector<16x128xf32>
    %198 = arith.mulf %165, %196 : vector<16x128xf32>
    %199 = arith.subf %198, %185 : vector<16x128xf32>
    %200 = math.exp %199 : vector<16x128xf32>
    %201 = arith.mulf %200, %197 : vector<16x128xf32>
    %202 = arith.addf %194, %201 : vector<16x128xf32>
    %203 = arith.addf %195, %200 : vector<16x128xf32>
    %c24_93 = arith.constant 24 : index
    %c384_94 = arith.constant 384 : index
    %204 = vector.load %arg4[%c24_93, %c384_94] : memref<48x1152xf32, #tpu.memory_space<vmem>>, vector<16x128xf32>
    %c24_95 = arith.constant 24 : index
    %c896_96 = arith.constant 896 : index
    %205 = vector.load %arg4[%c24_95, %c896_96] : memref<48x1152xf32, #tpu.memory_space<vmem>>, vector<16x128xf32>
    %206 = arith.mulf %165, %204 : vector<16x128xf32>
    %207 = arith.subf %206, %185 : vector<16x128xf32>
    %208 = math.exp %207 : vector<16x128xf32>
    %209 = arith.mulf %208, %205 : vector<16x128xf32>
    %210 = arith.addf %202, %209 : vector<16x128xf32>
    %211 = arith.addf %203, %208 : vector<16x128xf32>
    %c24_97 = arith.constant 24 : index
    %c512_98 = arith.constant 512 : index
    %212 = vector.load %arg4[%c24_97, %c512_98] : memref<48x1152xf32, #tpu.memory_space<vmem>>, vector<16x128xf32>
    %c24_99 = arith.constant 24 : index
    %c1024_100 = arith.constant 1024 : index
    %213 = vector.load %arg4[%c24_99, %c1024_100] : memref<48x1152xf32, #tpu.memory_space<vmem>>, vector<16x128xf32>
    %214 = arith.mulf %165, %212 : vector<16x128xf32>
    %215 = arith.subf %214, %185 : vector<16x128xf32>
    %216 = math.exp %215 : vector<16x128xf32>
    %217 = arith.mulf %216, %213 : vector<16x128xf32>
    %218 = arith.addf %210, %217 : vector<16x128xf32>
    %219 = arith.addf %211, %216 : vector<16x128xf32>
    %c25_101 = arith.constant 25 : index
    %c128_102 = arith.constant 128 : index
    %220 = vector.load %arg4[%c25_101, %c128_102] : memref<48x1152xf32, #tpu.memory_space<vmem>>, vector<16x128xf32>
    %c25_103 = arith.constant 25 : index
    %c640_104 = arith.constant 640 : index
    %221 = vector.load %arg4[%c25_103, %c640_104] : memref<48x1152xf32, #tpu.memory_space<vmem>>, vector<16x128xf32>
    %222 = arith.mulf %165, %220 : vector<16x128xf32>
    %223 = arith.subf %222, %185 : vector<16x128xf32>
    %224 = math.exp %223 : vector<16x128xf32>
    %225 = arith.mulf %224, %221 : vector<16x128xf32>
    %226 = arith.addf %218, %225 : vector<16x128xf32>
    %227 = arith.addf %219, %224 : vector<16x128xf32>
    %c25_105 = arith.constant 25 : index
    %c256_106 = arith.constant 256 : index
    %228 = vector.load %arg4[%c25_105, %c256_106] : memref<48x1152xf32, #tpu.memory_space<vmem>>, vector<16x128xf32>
    %c25_107 = arith.constant 25 : index
    %c768_108 = arith.constant 768 : index
    %229 = vector.load %arg4[%c25_107, %c768_108] : memref<48x1152xf32, #tpu.memory_space<vmem>>, vector<16x128xf32>
    %230 = arith.mulf %165, %228 : vector<16x128xf32>
    %231 = arith.subf %230, %185 : vector<16x128xf32>
    %232 = math.exp %231 : vector<16x128xf32>
    %233 = arith.mulf %232, %229 : vector<16x128xf32>
    %234 = arith.addf %226, %233 : vector<16x128xf32>
    %235 = arith.addf %227, %232 : vector<16x128xf32>
    %c25_109 = arith.constant 25 : index
    %c384_110 = arith.constant 384 : index
    %236 = vector.load %arg4[%c25_109, %c384_110] : memref<48x1152xf32, #tpu.memory_space<vmem>>, vector<16x128xf32>
    %c25_111 = arith.constant 25 : index
    %c896_112 = arith.constant 896 : index
    %237 = vector.load %arg4[%c25_111, %c896_112] : memref<48x1152xf32, #tpu.memory_space<vmem>>, vector<16x128xf32>
    %238 = arith.mulf %165, %236 : vector<16x128xf32>
    %239 = arith.subf %238, %185 : vector<16x128xf32>
    %240 = math.exp %239 : vector<16x128xf32>
    %241 = arith.mulf %240, %237 : vector<16x128xf32>
    %242 = arith.addf %234, %241 : vector<16x128xf32>
    %243 = arith.addf %235, %240 : vector<16x128xf32>
    %c25_113 = arith.constant 25 : index
    %c512_114 = arith.constant 512 : index
    %244 = vector.load %arg4[%c25_113, %c512_114] : memref<48x1152xf32, #tpu.memory_space<vmem>>, vector<16x128xf32>
    %c25_115 = arith.constant 25 : index
    %c1024_116 = arith.constant 1024 : index
    %245 = vector.load %arg4[%c25_115, %c1024_116] : memref<48x1152xf32, #tpu.memory_space<vmem>>, vector<16x128xf32>
    %246 = arith.mulf %165, %244 : vector<16x128xf32>
    %247 = arith.subf %246, %185 : vector<16x128xf32>
    %248 = math.exp %247 : vector<16x128xf32>
    %249 = arith.mulf %248, %245 : vector<16x128xf32>
    %250 = arith.addf %242, %249 : vector<16x128xf32>
    %251 = arith.addf %243, %248 : vector<16x128xf32>
    %c26 = arith.constant 26 : index
    %c128_117 = arith.constant 128 : index
    %252 = vector.load %arg4[%c26, %c128_117] : memref<48x1152xf32, #tpu.memory_space<vmem>>, vector<16x128xf32>
    %c26_118 = arith.constant 26 : index
    %c640_119 = arith.constant 640 : index
    %253 = vector.load %arg4[%c26_118, %c640_119] : memref<48x1152xf32, #tpu.memory_space<vmem>>, vector<16x128xf32>
    %254 = arith.mulf %165, %252 : vector<16x128xf32>
    %255 = arith.subf %254, %185 : vector<16x128xf32>
    %256 = math.exp %255 : vector<16x128xf32>
    %257 = arith.mulf %256, %253 : vector<16x128xf32>
    %258 = arith.addf %250, %257 : vector<16x128xf32>
    %259 = arith.addf %251, %256 : vector<16x128xf32>
    %c26_120 = arith.constant 26 : index
    %c256_121 = arith.constant 256 : index
    %260 = vector.load %arg4[%c26_120, %c256_121] : memref<48x1152xf32, #tpu.memory_space<vmem>>, vector<16x128xf32>
    %c26_122 = arith.constant 26 : index
    %c768_123 = arith.constant 768 : index
    %261 = vector.load %arg4[%c26_122, %c768_123] : memref<48x1152xf32, #tpu.memory_space<vmem>>, vector<16x128xf32>
    %262 = arith.mulf %165, %260 : vector<16x128xf32>
    %263 = arith.subf %262, %185 : vector<16x128xf32>
    %264 = math.exp %263 : vector<16x128xf32>
    %265 = arith.mulf %264, %261 : vector<16x128xf32>
    %266 = arith.addf %258, %265 : vector<16x128xf32>
    %267 = arith.addf %259, %264 : vector<16x128xf32>
    %c26_124 = arith.constant 26 : index
    %c384_125 = arith.constant 384 : index
    %268 = vector.load %arg4[%c26_124, %c384_125] : memref<48x1152xf32, #tpu.memory_space<vmem>>, vector<16x128xf32>
    %c26_126 = arith.constant 26 : index
    %c896_127 = arith.constant 896 : index
    %269 = vector.load %arg4[%c26_126, %c896_127] : memref<48x1152xf32, #tpu.memory_space<vmem>>, vector<16x128xf32>
    %270 = arith.mulf %165, %268 : vector<16x128xf32>
    %271 = arith.subf %270, %185 : vector<16x128xf32>
    %272 = math.exp %271 : vector<16x128xf32>
    %273 = arith.mulf %272, %269 : vector<16x128xf32>
    %274 = arith.addf %266, %273 : vector<16x128xf32>
    %275 = arith.addf %267, %272 : vector<16x128xf32>
    %c26_128 = arith.constant 26 : index
    %c512_129 = arith.constant 512 : index
    %276 = vector.load %arg4[%c26_128, %c512_129] : memref<48x1152xf32, #tpu.memory_space<vmem>>, vector<16x128xf32>
    %c26_130 = arith.constant 26 : index
    %c1024_131 = arith.constant 1024 : index
    %277 = vector.load %arg4[%c26_130, %c1024_131] : memref<48x1152xf32, #tpu.memory_space<vmem>>, vector<16x128xf32>
    %278 = arith.mulf %165, %276 : vector<16x128xf32>
    %279 = arith.subf %278, %185 : vector<16x128xf32>
    %280 = math.exp %279 : vector<16x128xf32>
    %281 = arith.mulf %280, %277 : vector<16x128xf32>
    %282 = arith.addf %274, %281 : vector<16x128xf32>
    %283 = arith.addf %275, %280 : vector<16x128xf32>
    %c27 = arith.constant 27 : index
    %c128_132 = arith.constant 128 : index
    %284 = vector.load %arg4[%c27, %c128_132] : memref<48x1152xf32, #tpu.memory_space<vmem>>, vector<16x128xf32>
    %c27_133 = arith.constant 27 : index
    %c640_134 = arith.constant 640 : index
    %285 = vector.load %arg4[%c27_133, %c640_134] : memref<48x1152xf32, #tpu.memory_space<vmem>>, vector<16x128xf32>
    %286 = arith.mulf %165, %284 : vector<16x128xf32>
    %287 = arith.subf %286, %185 : vector<16x128xf32>
    %288 = math.exp %287 : vector<16x128xf32>
    %289 = arith.mulf %288, %285 : vector<16x128xf32>
    %290 = arith.addf %282, %289 : vector<16x128xf32>
    %291 = arith.addf %283, %288 : vector<16x128xf32>
    %c27_135 = arith.constant 27 : index
    %c256_136 = arith.constant 256 : index
    %292 = vector.load %arg4[%c27_135, %c256_136] : memref<48x1152xf32, #tpu.memory_space<vmem>>, vector<16x128xf32>
    %c27_137 = arith.constant 27 : index
    %c768_138 = arith.constant 768 : index
    %293 = vector.load %arg4[%c27_137, %c768_138] : memref<48x1152xf32, #tpu.memory_space<vmem>>, vector<16x128xf32>
    %294 = arith.mulf %165, %292 : vector<16x128xf32>
    %295 = arith.subf %294, %185 : vector<16x128xf32>
    %296 = math.exp %295 : vector<16x128xf32>
    %297 = arith.mulf %296, %293 : vector<16x128xf32>
    %298 = arith.addf %290, %297 : vector<16x128xf32>
    %299 = arith.addf %291, %296 : vector<16x128xf32>
    %c27_139 = arith.constant 27 : index
    %c384_140 = arith.constant 384 : index
    %300 = vector.load %arg4[%c27_139, %c384_140] : memref<48x1152xf32, #tpu.memory_space<vmem>>, vector<16x128xf32>
    %c27_141 = arith.constant 27 : index
    %c896_142 = arith.constant 896 : index
    %301 = vector.load %arg4[%c27_141, %c896_142] : memref<48x1152xf32, #tpu.memory_space<vmem>>, vector<16x128xf32>
    %302 = arith.mulf %165, %300 : vector<16x128xf32>
    %303 = arith.subf %302, %185 : vector<16x128xf32>
    %304 = math.exp %303 : vector<16x128xf32>
    %305 = arith.mulf %304, %301 : vector<16x128xf32>
    %306 = arith.addf %298, %305 : vector<16x128xf32>
    %307 = arith.addf %299, %304 : vector<16x128xf32>
    %c27_143 = arith.constant 27 : index
    %c512_144 = arith.constant 512 : index
    %308 = vector.load %arg4[%c27_143, %c512_144] : memref<48x1152xf32, #tpu.memory_space<vmem>>, vector<16x128xf32>
    %c27_145 = arith.constant 27 : index
    %c1024_146 = arith.constant 1024 : index
    %309 = vector.load %arg4[%c27_145, %c1024_146] : memref<48x1152xf32, #tpu.memory_space<vmem>>, vector<16x128xf32>
    %310 = arith.mulf %165, %308 : vector<16x128xf32>
    %311 = arith.subf %310, %185 : vector<16x128xf32>
    %312 = math.exp %311 : vector<16x128xf32>
    %313 = arith.mulf %312, %309 : vector<16x128xf32>
    %314 = arith.addf %306, %313 : vector<16x128xf32>
    %315 = arith.addf %307, %312 : vector<16x128xf32>
    %316 = tpu.reciprocal %315 {approx = true} : vector<16x128xf32> -> vector<16x128xf32>
    %317 = arith.mulf %315, %316 : vector<16x128xf32>
    %cst_147 = arith.constant 2.000000e+00 : f32
    %318 = vector.broadcast %cst_147 : f32 to vector<16x128xf32>
    %319 = arith.subf %318, %317 : vector<16x128xf32>
    %320 = arith.mulf %316, %319 : vector<16x128xf32>
    %321 = arith.mulf %314, %320 : vector<16x128xf32>
    %c1_148 = arith.constant 1 : index
    %c0_149 = arith.constant 0 : index
    %c0_150 = arith.constant 0 : index
    %322 = vector.load %arg3[%c1_148, %c0_149, %c0_150] : memref<2x16x128xf32, #tpu.memory_space<vmem>>, vector<1x16x128xf32>
    %323 = vector.shape_cast %322 : vector<1x16x128xf32> to vector<16x128xf32>
    %324 = vector.shape_cast %321 : vector<16x128xf32> to vector<1x16x128xf32>
    tpu.vector_store %arg3[%c1_148, %c0_149, %c0_150], %324 {strides = array<i32>} : memref<2x16x128xf32, #tpu.memory_space<vmem>>, vector<1x16x128xf32>,
    return
  }
  func.func @transform_0(%arg0: i32) -> (i32, i32, i32) {
    %c0_i32 = arith.constant 0 : i32
    %c0_i32_0 = arith.constant 0 : i32
    %c0_i32_1 = arith.constant 0 : i32
    return %arg0, %c0_i32, %c0_i32_0 : i32, i32, i32
  }
  func.func @transform_1(%arg0: i32) -> (i32, i32) {
    %c0_i32 = arith.constant 0 : i32
    %c0_i32_0 = arith.constant 0 : i32
    %c0_i32_1 = arith.constant 0 : i32
    return %c0_i32, %c0_i32_0 : i32, i32
  }
  func.func @transform_2(%arg0: i32) -> (i32, i32, i32) {
    %c0_i32 = arith.constant 0 : i32
    %c0_i32_0 = arith.constant 0 : i32
    %c0_i32_1 = arith.constant 0 : i32
    return %arg0, %c0_i32, %c0_i32_0 : i32, i32, i32
  }
}

</mosaic_0001>

<llo_original>
// kernel: tpu_custom_call.1
$region0: #{tpu_custom_call.1}
  #allocation0 [shape = 'u32[]', space=smem, size = 0x4, offset = 0x4, fixed_abs, tag = 'smem constant byte address 0x4 - core index']
  #allocation1 [shape = 'u32[144,128]{1,0:T(1,128)}', space=vmem, size = 0x12000, scoped, tag = 'internal scratch']
  #allocation2 [shape = 'f32[48,1152]{1,0:T(8,128)}', space=vmem, size = 0x36000, scoped, tag = 'scratch operand']
  %s0 = inlined_call_operand.hbm [shape: f32[2,24,128], index: 0, kind: input, shape index: {}]
  %s1 = inlined_call_operand.hbm [shape: f32[128,1152], index: 1, kind: input, shape index: {}]
  %s2 = inlined_call_operand.hbm [shape: f32[2,16,128], index: 2, kind: output, shape index: {}]
  %s3 = sld [smem:[#allocation0]]
  $region26: #{tpu_custom_call.1} parent=0
    _
  %s5 = ssub.s32 1, %s3
  %s6 = scalar_select 0, %s5, %s3
  $region1: #{tpu_custom_call.1} parent=0
    #allocation3 [shape = 'u8[24576]{0}', space=vmem, size = 0x6000, scoped, tag = 'input window, operand 0, single buffered']
    #allocation4 [shape = 's32[1]{0}', space=sflag, size = 0x4, scoped, tag = 'scoped memory for tpu_custom_call.1']
    #allocation5 [shape = 's32[1]{0}', space=sflag, size = 0x4, scoped, tag = 'scoped memory for tpu_custom_call.1']
    #allocation6 [shape = 'u8[589824]{0}', space=vmem, size = 0x90000, scoped, tag = 'input window, operand 1, single buffered']
    #allocation7 [shape = 's32[1]{0}', space=sflag, size = 0x4, scoped, tag = 'scoped memory for tpu_custom_call.1']
    #allocation8 [shape = 'u8[16384]{0}', space=vmem, size = 0x4000, scoped, tag = 'output window, operand 0, single buffered']
    %7 = vsyncpa [#allocation4], 0
    %8 = vsyncpa [#allocation7], 0
    %9 = vsyncpa [#allocation5], 0
    // Predicated region
    $region2: #{tpu_custom_call.1} parent=1 // pred_check
      _
    $region3: #{tpu_custom_call.1} parent=1 // pred_check_branch
      %11 = sbr.rel (0) target = $region5
    $region4: #{tpu_custom_call.1} parent=1 // pred_region
      %s13 = ssub.s32 768, 768
      %14 = vsyncadd [#allocation4], %s13
      %s15 = sshll.u32 [#allocation3], 4
      %s16 = int_to_ptr.vmem [resolvable:$true] %s15
      %21 = dma.hbm_to_vmem [thread:$0]  %s0, 768, %s16, [#allocation4], 128, 128, 8
    $region5: #{tpu_custom_call.1} parent=1 // pred_fallthru
      _
    // Predicated region
    $region6: #{tpu_custom_call.1} parent=1 // pred_check
      _
    $region7: #{tpu_custom_call.1} parent=1 // pred_check_branch
      %23 = sbr.rel (0) target = $region9
    $region8: #{tpu_custom_call.1} parent=1 // pred_region
      %s25 = ssub.s32 18432, 18432
      %26 = vsyncadd [#allocation7], %s25
      %s27 = sshll.u32 [#allocation6], 4
      %s28 = int_to_ptr.vmem [resolvable:$true] %s27
      %33 = dma.hbm_to_vmem [thread:$0]  %s1, 18432, %s28, [#allocation7], 1152, 1152, 72
    $region9: #{tpu_custom_call.1} parent=1 // pred_fallthru
      _
    // Predicated region
    $region10: #{tpu_custom_call.1} parent=1 // pred_check
      _
    $region11: #{tpu_custom_call.1} parent=1 // pred_check_branch
      %35 = sbr.rel (0) target = $region13
    $region12: #{tpu_custom_call.1} parent=1 // pred_region
      %36 = dma.done [#allocation4], 768
    $region13: #{tpu_custom_call.1} parent=1 // pred_fallthru
      _
    // Predicated region
    $region14: #{tpu_custom_call.1} parent=1 // pred_check
      _
    $region15: #{tpu_custom_call.1} parent=1 // pred_check_branch
      %38 = sbr.rel (0) target = $region17
    $region16: #{tpu_custom_call.1} parent=1 // pred_region
      %39 = dma.done [#allocation7], 18432
    $region17: #{tpu_custom_call.1} parent=1 // pred_fallthru
      _
    %v40 = vld [vmem:[#allocation3] sm:$0xff]
    %v41 = vld [vmem:[#allocation3 + $0x8] sm:$0xff]
    %v42 = vld [vmem:[#allocation3 + $0x10] sm:$0xff]
    %v43 = vld [vmem:[#allocation3 + $0x18] sm:$0xff]
    %v44 = vld [vmem:[#allocation3 + $0x20] sm:$0xff]
    %v45 = vld [vmem:[#allocation3 + $0x28] sm:$0xff]
    %v46 = vld [vmem:[#allocation6] sm:$0xff]
    %v47 = vld [vmem:[#allocation6 + $0x8] sm:$0xff]
    %v48 = vld [vmem:[#allocation6 + $0x10] sm:$0xff]
    %v49 = vld [vmem:[#allocation6 + $0x18] sm:$0xff]
    %v50 = vld [vmem:[#allocation6 + $0x20] sm:$0xff]
    %v51 = vld [vmem:[#allocation6 + $0x28] sm:$0xff]
    %v52 = vld [vmem:[#allocation6 + $0x30] sm:$0xff]
    %v53 = vld [vmem:[#allocation6 + $0x38] sm:$0xff]
    %v54 = vld [vmem:[#allocation6 + $0x40] sm:$0xff]
    %v55 = vld [vmem:[#allocation6 + $0x48] sm:$0xff]
    %v56 = vld [vmem:[#allocation6 + $0x50] sm:$0xff]
    %v57 = vld [vmem:[#allocation6 + $0x58] sm:$0xff]
    %v58 = vld [vmem:[#allocation6 + $0x60] sm:$0xff]
    %v59 = vld [vmem:[#allocation6 + $0x68] sm:$0xff]
    %v60 = vld [vmem:[#allocation6 + $0x70] sm:$0xff]
    %v61 = vld [vmem:[#allocation6 + $0x78] sm:$0xff]
    %v62 = vld [vmem:[#allocation6 + $0x80] sm:$0xff]
    %v63 = vld [vmem:[#allocation6 + $0x88] sm:$0xff]
    %v64 = vld [vmem:[#allocation6 + $0x90] sm:$0xff]
    %v65 = vld [vmem:[#allocation6 + $0x98] sm:$0xff]
    %v66 = vld [vmem:[#allocation6 + $0xa0] sm:$0xff]
    %v67 = vld [vmem:[#allocation6 + $0xa8] sm:$0xff]
    %v68 = vld [vmem:[#allocation6 + $0xb0] sm:$0xff]
    %v69 = vld [vmem:[#allocation6 + $0xb8] sm:$0xff]
    %v70 = vld [vmem:[#allocation6 + $0xc0] sm:$0xff]
    %v71 = vld [vmem:[#allocation6 + $0xc8] sm:$0xff]
    %v72 = vld [vmem:[#allocation6 + $0xd0] sm:$0xff]
    %v73 = vld [vmem:[#allocation6 + $0xd8] sm:$0xff]
    %v74 = vld [vmem:[#allocation6 + $0xe0] sm:$0xff]
    %v75 = vld [vmem:[#allocation6 + $0xe8] sm:$0xff]
    %v76 = vld [vmem:[#allocation6 + $0xf0] sm:$0xff]
    %v77 = vld [vmem:[#allocation6 + $0xf8] sm:$0xff]
    %v78 = vld [vmem:[#allocation6 + $0x100] sm:$0xff]
    %v79 = vld [vmem:[#allocation6 + $0x108] sm:$0xff]
    %v80 = vld [vmem:[#allocation6 + $0x110] sm:$0xff]
    %v81 = vld [vmem:[#allocation6 + $0x118] sm:$0xff]
    %v82 = vld [vmem:[#allocation6 + $0x120] sm:$0xff]
    %v83 = vld [vmem:[#allocation6 + $0x128] sm:$0xff]
    %v84 = vld [vmem:[#allocation6 + $0x130] sm:$0xff]
    %v85 = vld [vmem:[#allocation6 + $0x138] sm:$0xff]
    %v86 = vld [vmem:[#allocation6 + $0x140] sm:$0xff]
    %v87 = vld [vmem:[#allocation6 + $0x148] sm:$0xff]
    %v88 = vld [vmem:[#allocation6 + $0x150] sm:$0xff]
    %v89 = vld [vmem:[#allocation6 + $0x158] sm:$0xff]
    %v90 = vld [vmem:[#allocation6 + $0x160] sm:$0xff]
    %v91 = vld [vmem:[#allocation6 + $0x168] sm:$0xff]
    %v92 = vld [vmem:[#allocation6 + $0x170] sm:$0xff]
    %v93 = vld [vmem:[#allocation6 + $0x178] sm:$0xff]
    %v94 = vld [vmem:[#allocation6 + $0x180] sm:$0xff]
    %v95 = vld [vmem:[#allocation6 + $0x188] sm:$0xff]
    %v96 = vld [vmem:[#allocation6 + $0x190] sm:$0xff]
    %v97 = vld [vmem:[#allocation6 + $0x198] sm:$0xff]
    %v98 = vld [vmem:[#allocation6 + $0x1a0] sm:$0xff]
    %v99 = vld [vmem:[#allocation6 + $0x1a8] sm:$0xff]
    %v100 = vld [vmem:[#allocation6 + $0x1b0] sm:$0xff]
    %v101 = vld [vmem:[#allocation6 + $0x1b8] sm:$0xff]
    %v102 = vld [vmem:[#allocation6 + $0x1c0] sm:$0xff]
    %v103 = vld [vmem:[#allocation6 + $0x1c8] sm:$0xff]
    %v104 = vld [vmem:[#allocation6 + $0x1d0] sm:$0xff]
    %v105 = vld [vmem:[#allocation6 + $0x1d8] sm:$0xff]
    %v106 = vld [vmem:[#allocation6 + $0x1e0] sm:$0xff]
    %v107 = vld [vmem:[#allocation6 + $0x1e8] sm:$0xff]
    %v108 = vld [vmem:[#allocation6 + $0x1f0] sm:$0xff]
    %v109 = vld [vmem:[#allocation6 + $0x1f8] sm:$0xff]
    %v110 = vld [vmem:[#allocation6 + $0x200] sm:$0xff]
    %v111 = vld [vmem:[#allocation6 + $0x208] sm:$0xff]
    %v112 = vld [vmem:[#allocation6 + $0x210] sm:$0xff]
    %v113 = vld [vmem:[#allocation6 + $0x218] sm:$0xff]
    %v114 = vld [vmem:[#allocation6 + $0x220] sm:$0xff]
    %v115 = vld [vmem:[#allocation6 + $0x228] sm:$0xff]
    %v116 = vld [vmem:[#allocation6 + $0x230] sm:$0xff]
    %v117 = vld [vmem:[#allocation6 + $0x238] sm:$0xff]
    %v118 = vld [vmem:[#allocation6 + $0x240] sm:$0xff]
    %v119 = vld [vmem:[#allocation6 + $0x248] sm:$0xff]
    %v120 = vld [vmem:[#allocation6 + $0x250] sm:$0xff]
    %v121 = vld [vmem:[#allocation6 + $0x258] sm:$0xff]
    %v122 = vld [vmem:[#allocation6 + $0x260] sm:$0xff]
    %v123 = vld [vmem:[#allocation6 + $0x268] sm:$0xff]
    %v124 = vld [vmem:[#allocation6 + $0x270] sm:$0xff]
    %v125 = vld [vmem:[#allocation6 + $0x278] sm:$0xff]
    %v126 = vld [vmem:[#allocation6 + $0x280] sm:$0xff]
    %v127 = vld [vmem:[#allocation6 + $0x288] sm:$0xff]
    %v128 = vld [vmem:[#allocation6 + $0x290] sm:$0xff]
    %v129 = vld [vmem:[#allocation6 + $0x298] sm:$0xff]
    %v130 = vld [vmem:[#allocation6 + $0x2a0] sm:$0xff]
    %v131 = vld [vmem:[#allocation6 + $0x2a8] sm:$0xff]
    %v132 = vld [vmem:[#allocation6 + $0x2b0] sm:$0xff]
    %v133 = vld [vmem:[#allocation6 + $0x2b8] sm:$0xff]
    %v134 = vld [vmem:[#allocation6 + $0x2c0] sm:$0xff]
    %v135 = vld [vmem:[#allocation6 + $0x2c8] sm:$0xff]
    %v136 = vld [vmem:[#allocation6 + $0x2d0] sm:$0xff]
    %v137 = vld [vmem:[#allocation6 + $0x2d8] sm:$0xff]
    %v138 = vld [vmem:[#allocation6 + $0x2e0] sm:$0xff]
    %v139 = vld [vmem:[#allocation6 + $0x2e8] sm:$0xff]
    %v140 = vld [vmem:[#allocation6 + $0x2f0] sm:$0xff]
    %v141 = vld [vmem:[#allocation6 + $0x2f8] sm:$0xff]
    %v142 = vld [vmem:[#allocation6 + $0x300] sm:$0xff]
    %v143 = vld [vmem:[#allocation6 + $0x308] sm:$0xff]
    %v144 = vld [vmem:[#allocation6 + $0x310] sm:$0xff]
    %v145 = vld [vmem:[#allocation6 + $0x318] sm:$0xff]
    %v146 = vld [vmem:[#allocation6 + $0x320] sm:$0xff]
    %v147 = vld [vmem:[#allocation6 + $0x328] sm:$0xff]
    %v148 = vld [vmem:[#allocation6 + $0x330] sm:$0xff]
    %v149 = vld [vmem:[#allocation6 + $0x338] sm:$0xff]
    %v150 = vld [vmem:[#allocation6 + $0x340] sm:$0xff]
    %v151 = vld [vmem:[#allocation6 + $0x348] sm:$0xff]
    %v152 = vld [vmem:[#allocation6 + $0x350] sm:$0xff]
    %v153 = vld [vmem:[#allocation6 + $0x358] sm:$0xff]
    %v154 = vld [vmem:[#allocation6 + $0x360] sm:$0xff]
    %v155 = vld [vmem:[#allocation6 + $0x368] sm:$0xff]
    %v156 = vld [vmem:[#allocation6 + $0x370] sm:$0xff]
    %v157 = vld [vmem:[#allocation6 + $0x378] sm:$0xff]
    %v158 = vld [vmem:[#allocation6 + $0x380] sm:$0xff]
    %v159 = vld [vmem:[#allocation6 + $0x388] sm:$0xff]
    %v160 = vld [vmem:[#allocation6 + $0x390] sm:$0xff]
    %v161 = vld [vmem:[#allocation6 + $0x398] sm:$0xff]
    %v162 = vld [vmem:[#allocation6 + $0x3a0] sm:$0xff]
    %v163 = vld [vmem:[#allocation6 + $0x3a8] sm:$0xff]
    %v164 = vld [vmem:[#allocation6 + $0x3b0] sm:$0xff]
    %v165 = vld [vmem:[#allocation6 + $0x3b8] sm:$0xff]
    %v166 = vld [vmem:[#allocation6 + $0x3c0] sm:$0xff]
    %v167 = vld [vmem:[#allocation6 + $0x3c8] sm:$0xff]
    %v168 = vld [vmem:[#allocation6 + $0x3d0] sm:$0xff]
    %v169 = vld [vmem:[#allocation6 + $0x3d8] sm:$0xff]
    %v170 = vld [vmem:[#allocation6 + $0x3e0] sm:$0xff]
    %v171 = vld [vmem:[#allocation6 + $0x3e8] sm:$0xff]
    %v172 = vld [vmem:[#allocation6 + $0x3f0] sm:$0xff]
    %v173 = vld [vmem:[#allocation6 + $0x3f8] sm:$0xff]
    %v174 = vld [vmem:[#allocation6 + $0x400] sm:$0xff]
    %v175 = vld [vmem:[#allocation6 + $0x408] sm:$0xff]
    %v176 = vld [vmem:[#allocation6 + $0x410] sm:$0xff]
    %v177 = vld [vmem:[#allocation6 + $0x418] sm:$0xff]
    %v178 = vld [vmem:[#allocation6 + $0x420] sm:$0xff]
    %v179 = vld [vmem:[#allocation6 + $0x428] sm:$0xff]
    %v180 = vld [vmem:[#allocation6 + $0x430] sm:$0xff]
    %v181 = vld [vmem:[#allocation6 + $0x438] sm:$0xff]
    %v182 = vld [vmem:[#allocation6 + $0x440] sm:$0xff]
    %v183 = vld [vmem:[#allocation6 + $0x448] sm:$0xff]
    %v184 = vld [vmem:[#allocation6 + $0x450] sm:$0xff]
    %v185 = vld [vmem:[#allocation6 + $0x458] sm:$0xff]
    %v186 = vld [vmem:[#allocation6 + $0x460] sm:$0xff]
    %v187 = vld [vmem:[#allocation6 + $0x468] sm:$0xff]
    %v188 = vld [vmem:[#allocation6 + $0x470] sm:$0xff]
    %v189 = vld [vmem:[#allocation6 + $0x478] sm:$0xff]
    %190 = vmatprep.subr.mxu0 %v47
    %191 = vmatpush1.msra.mxu0 %v46
    %192 = vmatprep.subr.mxu0 %v56
    %193 = vmatpush1.msra.mxu0 %v55
    %194 = vmatprep.subr.mxu0 %v65
    %195 = vmatpush1.msra.mxu0 %v64
    %196 = vmatprep.subr.mxu0 %v74
    %197 = vmatpush1.msra.mxu0 %v73
    %198 = vmatprep.subr.mxu0 %v83
    %199 = vmatpush1.msra.mxu0 %v82
    %200 = vmatprep.subr.mxu0 %v92
    %201 = vmatpush1.msra.mxu0 %v91
    %202 = vmatprep.subr.mxu0 %v101
    %203 = vmatpush1.msra.mxu0 %v100
    %204 = vmatprep.subr.mxu0 %v110
    %205 = vmatpush1.msra.mxu0 %v109
    %206 = vmatprep.subr.mxu0 %v119
    %207 = vmatpush1.msra.mxu0 %v118
    %208 = vmatprep.subr.mxu0 %v128
    %209 = vmatpush1.msra.mxu0 %v127
    %210 = vmatprep.subr.mxu0 %v137
    %211 = vmatpush1.msra.mxu0 %v136
    %212 = vmatprep.subr.mxu0 %v146
    %213 = vmatpush1.msra.mxu0 %v145
    %214 = vmatprep.subr.mxu0 %v155
    %215 = vmatpush1.msra.mxu0 %v154
    %216 = vmatprep.subr.mxu0 %v164
    %217 = vmatpush1.msra.mxu0 %v163
    %218 = vmatprep.subr.mxu0 %v173
    %219 = vmatpush1.msra.mxu0 %v172
    %220 = vmatprep.subr.mxu0 %v182
    %221 = vmatpush1.msra.mxu0 %v181
    %222 = vmatprep.subr.mxu0 0.0
    %223 = vmatpush1.msra.mxu0 0.0
    %224 = vmatprep.subr.mxu0 0.0
    %225 = vmatpush1.msra.mxu0 0.0
    %226 = vmatprep.subr.mxu0 0.0
    %227 = vmatpush1.msra.mxu0 0.0
    %228 = vmatprep.subr.mxu0 0.0
    %229 = vmatpush1.msra.mxu0 0.0
    %230 = vmatprep.subr.mxu0 0.0
    %231 = vmatpush1.msra.mxu0 0.0
    %232 = vmatprep.subr.mxu0 0.0
    %233 = vmatpush1.msra.mxu0 0.0
    %234 = vmatprep.subr.mxu0 0.0
    %235 = vmatpush1.msra.mxu0 0.0
    %236 = vmatprep.subr.mxu0 0.0
    %237 = vmatpush1.msra.mxu0 0.0
    %238 = vmatprep.subr.mxu0 0.0
    %239 = vmatpush1.msra.mxu0 0.0
    %240 = vmatprep.subr.mxu0 0.0
    %241 = vmatpush1.msra.mxu0 0.0
    %242 = vmatprep.subr.mxu0 0.0
    %243 = vmatpush1.msra.mxu0 0.0
    %244 = vmatprep.subr.mxu0 0.0
    %245 = vmatpush1.msra.mxu0 0.0
    %246 = vmatprep.subr.mxu0 0.0
    %247 = vmatpush1.msra.mxu0 0.0
    %248 = vmatprep.subr.mxu0 0.0
    %249 = vmatpush1.msra.mxu0 0.0
    %250 = vmatprep.subr.mxu0 0.0
    %251 = vmatpush1.msra.mxu0 0.0
    %252 = vmatprep.subr.mxu0 0.0
    %253 = vmatpush1.msra.mxu0 0.0
    %254 = vmatprep.mubr.f32.mxu0 0.0
    %255 = vmatmul.mubr.f32.gmra.mrb[0].mxu0 %v40
    %v256 = vpop.f32.mrb[0].mxu0
    %v257 = vadd.f32 0.0, %v256
    %v258 = vpop.f32.mrb[0].mxu0
    %v259 = vadd.f32 0.0, %v258
    %260 = vmatprep.mubr.f32.mxu0 0.0
    %261 = vmatmul.mubr.f32.gmra.mrb[0].mxu0 %v41
    %v262 = vpop.f32.mrb[0].mxu0
    %v263 = vadd.f32 0.0, %v262
    %v264 = vpop.f32.mrb[0].mxu0
    %v265 = vadd.f32 0.0, %v264
    %266 = vmatprep.mubr.f32.mxu0 0.0
    %267 = vmatmul.mubr.f32.gmra.mrb[0].mxu0 %v42
    %v268 = vpop.f32.mrb[0].mxu0
    %v269 = vadd.f32 0.0, %v268
    %v270 = vpop.f32.mrb[0].mxu0
    %v271 = vadd.f32 0.0, %v270
    %272 = vmatprep.mubr.f32.mxu0 0.0
    %273 = vmatmul.mubr.f32.gmra.mrb[0].mxu0 %v43
    %v274 = vpop.f32.mrb[0].mxu0
    %v275 = vadd.f32 0.0, %v274
    %v276 = vpop.f32.mrb[0].mxu0
    %v277 = vadd.f32 0.0, %v276
    %278 = vmatprep.mubr.f32.mxu0 0.0
    %279 = vmatmul.mubr.f32.gmra.mrb[0].mxu0 %v44
    %v280 = vpop.f32.mrb[0].mxu0
    %v281 = vadd.f32 0.0, %v280
    %v282 = vpop.f32.mrb[0].mxu0
    %v283 = vadd.f32 0.0, %v282
    %284 = vmatprep.mubr.f32.mxu0 0.0
    %285 = vmatmul.mubr.f32.gmra.mrb[0].mxu0 %v45
    %v286 = vpop.f32.mrb[0].mxu0
    %v287 = vadd.f32 0.0, %v286
    %v288 = vpop.f32.mrb[0].mxu0
    %v289 = vadd.f32 0.0, %v288
    %290 = vdwg.mxu0
    %291 = vmatprep.subr.mxu0 %v49
    %292 = vmatpush1.msra.mxu0 %v48
    %293 = vmatprep.subr.mxu0 %v58
    %294 = vmatpush1.msra.mxu0 %v57
    %295 = vmatprep.subr.mxu0 %v67
    %296 = vmatpush1.msra.mxu0 %v66
    %297 = vmatprep.subr.mxu0 %v76
    %298 = vmatpush1.msra.mxu0 %v75
    %299 = vmatprep.subr.mxu0 %v85
    %300 = vmatpush1.msra.mxu0 %v84
    %301 = vmatprep.subr.mxu0 %v94
    %302 = vmatpush1.msra.mxu0 %v93
    %303 = vmatprep.subr.mxu0 %v103
    %304 = vmatpush1.msra.mxu0 %v102
    %305 = vmatprep.subr.mxu0 %v112
    %306 = vmatpush1.msra.mxu0 %v111
    %307 = vmatprep.subr.mxu0 %v121
    %308 = vmatpush1.msra.mxu0 %v120
    %309 = vmatprep.subr.mxu0 %v130
    %310 = vmatpush1.msra.mxu0 %v129
    %311 = vmatprep.subr.mxu0 %v139
    %312 = vmatpush1.msra.mxu0 %v138
    %313 = vmatprep.subr.mxu0 %v148
    %314 = vmatpush1.msra.mxu0 %v147
    %315 = vmatprep.subr.mxu0 %v157
    %316 = vmatpush1.msra.mxu0 %v156
    %317 = vmatprep.subr.mxu0 %v166
    %318 = vmatpush1.msra.mxu0 %v165
    %319 = vmatprep.subr.mxu0 %v175
    %320 = vmatpush1.msra.mxu0 %v174
    %321 = vmatprep.subr.mxu0 %v184
    %322 = vmatpush1.msra.mxu0 %v183
    %323 = vmatprep.subr.mxu0 0.0
    %324 = vmatpush1.msra.mxu0 0.0
    %325 = vmatprep.subr.mxu0 0.0
    %326 = vmatpush1.msra.mxu0 0.0
    %327 = vmatprep.subr.mxu0 0.0
    %328 = vmatpush1.msra.mxu0 0.0
    %329 = vmatprep.subr.mxu0 0.0
    %330 = vmatpush1.msra.mxu0 0.0
    %331 = vmatprep.subr.mxu0 0.0
    %332 = vmatpush1.msra.mxu0 0.0
    %333 = vmatprep.subr.mxu0 0.0
    %334 = vmatpush1.msra.mxu0 0.0
    %335 = vmatprep.subr.mxu0 0.0
    %336 = vmatpush1.msra.mxu0 0.0
    %337 = vmatprep.subr.mxu0 0.0
    %338 = vmatpush1.msra.mxu0 0.0
    %339 = vmatprep.subr.mxu0 0.0
    %340 = vmatpush1.msra.mxu0 0.0
    %341 = vmatprep.subr.mxu0 0.0
    %342 = vmatpush1.msra.mxu0 0.0
    %343 = vmatprep.subr.mxu0 0.0
    %344 = vmatpush1.msra.mxu0 0.0
    %345 = vmatprep.subr.mxu0 0.0
    %346 = vmatpush1.msra.mxu0 0.0
    %347 = vmatprep.subr.mxu0 0.0
    %348 = vmatpush1.msra.mxu0 0.0
    %349 = vmatprep.subr.mxu0 0.0
    %350 = vmatpush1.msra.mxu0 0.0
    %351 = vmatprep.subr.mxu0 0.0
    %352 = vmatpush1.msra.mxu0 0.0
    %353 = vmatprep.subr.mxu0 0.0
    %354 = vmatpush1.msra.mxu0 0.0
    %355 = vmatprep.mubr.f32.mxu0 0.0
    %356 = vmatmul.mubr.f32.gmra.mrb[0].mxu0 %v40
    %v357 = vpop.f32.mrb[0].mxu0
    %v358 = vadd.f32 0.0, %v357
    %v359 = vpop.f32.mrb[0].mxu0
    %v360 = vadd.f32 0.0, %v359
    %361 = vmatprep.mubr.f32.mxu0 0.0
    %362 = vmatmul.mubr.f32.gmra.mrb[0].mxu0 %v41
    %v363 = vpop.f32.mrb[0].mxu0
    %v364 = vadd.f32 0.0, %v363
    %v365 = vpop.f32.mrb[0].mxu0
    %v366 = vadd.f32 0.0, %v365
    %367 = vmatprep.mubr.f32.mxu0 0.0
    %368 = vmatmul.mubr.f32.gmra.mrb[0].mxu0 %v42
    %v369 = vpop.f32.mrb[0].mxu0
    %v370 = vadd.f32 0.0, %v369
    %v371 = vpop.f32.mrb[0].mxu0
    %v372 = vadd.f32 0.0, %v371
    %373 = vmatprep.mubr.f32.mxu0 0.0
    %374 = vmatmul.mubr.f32.gmra.mrb[0].mxu0 %v43
    %v375 = vpop.f32.mrb[0].mxu0
    %v376 = vadd.f32 0.0, %v375
    %v377 = vpop.f32.mrb[0].mxu0
    %v378 = vadd.f32 0.0, %v377
    %379 = vmatprep.mubr.f32.mxu0 0.0
    %380 = vmatmul.mubr.f32.gmra.mrb[0].mxu0 %v44
    %v381 = vpop.f32.mrb[0].mxu0
    %v382 = vadd.f32 0.0, %v381
    %v383 = vpop.f32.mrb[0].mxu0
    %v384 = vadd.f32 0.0, %v383
    %385 = vmatprep.mubr.f32.mxu0 0.0
    %386 = vmatmul.mubr.f32.gmra.mrb[0].mxu0 %v45
    %v387 = vpop.f32.mrb[0].mxu0
    %v388 = vadd.f32 0.0, %v387
    %v389 = vpop.f32.mrb[0].mxu0
    %v390 = vadd.f32 0.0, %v389
    %391 = vdwg.mxu0
    %392 = vmatprep.subr.mxu0 %v51
    %393 = vmatpush1.msra.mxu0 %v50
    %394 = vmatprep.subr.mxu0 %v60
    %395 = vmatpush1.msra.mxu0 %v59
    %396 = vmatprep.subr.mxu0 %v69
    %397 = vmatpush1.msra.mxu0 %v68
    %398 = vmatprep.subr.mxu0 %v78
    %399 = vmatpush1.msra.mxu0 %v77
    %400 = vmatprep.subr.mxu0 %v87
    %401 = vmatpush1.msra.mxu0 %v86
    %402 = vmatprep.subr.mxu0 %v96
    %403 = vmatpush1.msra.mxu0 %v95
    %404 = vmatprep.subr.mxu0 %v105
    %405 = vmatpush1.msra.mxu0 %v104
    %406 = vmatprep.subr.mxu0 %v114
    %407 = vmatpush1.msra.mxu0 %v113
    %408 = vmatprep.subr.mxu0 %v123
    %409 = vmatpush1.msra.mxu0 %v122
    %410 = vmatprep.subr.mxu0 %v132
    %411 = vmatpush1.msra.mxu0 %v131
    %412 = vmatprep.subr.mxu0 %v141
    %413 = vmatpush1.msra.mxu0 %v140
    %414 = vmatprep.subr.mxu0 %v150
    %415 = vmatpush1.msra.mxu0 %v149
    %416 = vmatprep.subr.mxu0 %v159
    %417 = vmatpush1.msra.mxu0 %v158
    %418 = vmatprep.subr.mxu0 %v168
    %419 = vmatpush1.msra.mxu0 %v167
    %420 = vmatprep.subr.mxu0 %v177
    %421 = vmatpush1.msra.mxu0 %v176
    %422 = vmatprep.subr.mxu0 %v186
    %423 = vmatpush1.msra.mxu0 %v185
    %424 = vmatprep.subr.mxu0 0.0
    %425 = vmatpush1.msra.mxu0 0.0
    %426 = vmatprep.subr.mxu0 0.0
    %427 = vmatpush1.msra.mxu0 0.0
    %428 = vmatprep.subr.mxu0 0.0
    %429 = vmatpush1.msra.mxu0 0.0
    %430 = vmatprep.subr.mxu0 0.0
    %431 = vmatpush1.msra.mxu0 0.0
    %432 = vmatprep.subr.mxu0 0.0
    %433 = vmatpush1.msra.mxu0 0.0
    %434 = vmatprep.subr.mxu0 0.0
    %435 = vmatpush1.msra.mxu0 0.0
    %436 = vmatprep.subr.mxu0 0.0
    %437 = vmatpush1.msra.mxu0 0.0
    %438 = vmatprep.subr.mxu0 0.0
    %439 = vmatpush1.msra.mxu0 0.0
    %440 = vmatprep.subr.mxu0 0.0
    %441 = vmatpush1.msra.mxu0 0.0
    %442 = vmatprep.subr.mxu0 0.0
    %443 = vmatpush1.msra.mxu0 0.0
    %444 = vmatprep.subr.mxu0 0.0
    %445 = vmatpush1.msra.mxu0 0.0
    %446 = vmatprep.subr.mxu0 0.0
    %447 = vmatpush1.msra.mxu0 0.0
    %448 = vmatprep.subr.mxu0 0.0
    %449 = vmatpush1.msra.mxu0 0.0
    %450 = vmatprep.subr.mxu0 0.0
    %451 = vmatpush1.msra.mxu0 0.0
    %452 = vmatprep.subr.mxu0 0.0
    %453 = vmatpush1.msra.mxu0 0.0
    %454 = vmatprep.subr.mxu0 0.0
    %455 = vmatpush1.msra.mxu0 0.0
    %456 = vmatprep.mubr.f32.mxu0 0.0
    %457 = vmatmul.mubr.f32.gmra.mrb[0].mxu0 %v40
    %v458 = vpop.f32.mrb[0].mxu0
    %v459 = vadd.f32 0.0, %v458
    %v460 = vpop.f32.mrb[0].mxu0
    %v461 = vadd.f32 0.0, %v460
    %462 = vmatprep.mubr.f32.mxu0 0.0
    %463 = vmatmul.mubr.f32.gmra.mrb[0].mxu0 %v41
    %v464 = vpop.f32.mrb[0].mxu0
    %v465 = vadd.f32 0.0, %v464
    %v466 = vpop.f32.mrb[0].mxu0
    %v467 = vadd.f32 0.0, %v466
    %468 = vmatprep.mubr.f32.mxu0 0.0
    %469 = vmatmul.mubr.f32.gmra.mrb[0].mxu0 %v42
    %v470 = vpop.f32.mrb[0].mxu0
    %v471 = vadd.f32 0.0, %v470
    %v472 = vpop.f32.mrb[0].mxu0
    %v473 = vadd.f32 0.0, %v472
    %474 = vmatprep.mubr.f32.mxu0 0.0
    %475 = vmatmul.mubr.f32.gmra.mrb[0].mxu0 %v43
    %v476 = vpop.f32.mrb[0].mxu0
    %v477 = vadd.f32 0.0, %v476
    %v478 = vpop.f32.mrb[0].mxu0
    %v479 = vadd.f32 0.0, %v478
    %480 = vmatprep.mubr.f32.mxu0 0.0
    %481 = vmatmul.mubr.f32.gmra.mrb[0].mxu0 %v44
    %v482 = vpop.f32.mrb[0].mxu0
    %v483 = vadd.f32 0.0, %v482
    %v484 = vpop.f32.mrb[0].mxu0
    %v485 = vadd.f32 0.0, %v484
    %486 = vmatprep.mubr.f32.mxu0 0.0
    %487 = vmatmul.mubr.f32.gmra.mrb[0].mxu0 %v45
    %v488 = vpop.f32.mrb[0].mxu0
    %v489 = vadd.f32 0.0, %v488
    %v490 = vpop.f32.mrb[0].mxu0
    %v491 = vadd.f32 0.0, %v490
    %492 = vdwg.mxu0
    %493 = vmatprep.subr.mxu0 %v53
    %494 = vmatpush1.msra.mxu0 %v52
    %495 = vmatprep.subr.mxu0 %v62
    %496 = vmatpush1.msra.mxu0 %v61
    %497 = vmatprep.subr.mxu0 %v71
    %498 = vmatpush1.msra.mxu0 %v70
    %499 = vmatprep.subr.mxu0 %v80
    %500 = vmatpush1.msra.mxu0 %v79
    %501 = vmatprep.subr.mxu0 %v89
    %502 = vmatpush1.msra.mxu0 %v88
    %503 = vmatprep.subr.mxu0 %v98
    %504 = vmatpush1.msra.mxu0 %v97
    %505 = vmatprep.subr.mxu0 %v107
    %506 = vmatpush1.msra.mxu0 %v106
    %507 = vmatprep.subr.mxu0 %v116
    %508 = vmatpush1.msra.mxu0 %v115
    %509 = vmatprep.subr.mxu0 %v125
    %510 = vmatpush1.msra.mxu0 %v124
    %511 = vmatprep.subr.mxu0 %v134
    %512 = vmatpush1.msra.mxu0 %v133
    %513 = vmatprep.subr.mxu0 %v143
    %514 = vmatpush1.msra.mxu0 %v142
    %515 = vmatprep.subr.mxu0 %v152
    %516 = vmatpush1.msra.mxu0 %v151
    %517 = vmatprep.subr.mxu0 %v161
    %518 = vmatpush1.msra.mxu0 %v160
    %519 = vmatprep.subr.mxu0 %v170
    %520 = vmatpush1.msra.mxu0 %v169
    %521 = vmatprep.subr.mxu0 %v179
    %522 = vmatpush1.msra.mxu0 %v178
    %523 = vmatprep.subr.mxu0 %v188
    %524 = vmatpush1.msra.mxu0 %v187
    %525 = vmatprep.subr.mxu0 0.0
    %526 = vmatpush1.msra.mxu0 0.0
    %527 = vmatprep.subr.mxu0 0.0
    %528 = vmatpush1.msra.mxu0 0.0
    %529 = vmatprep.subr.mxu0 0.0
    %530 = vmatpush1.msra.mxu0 0.0
    %531 = vmatprep.subr.mxu0 0.0
    %532 = vmatpush1.msra.mxu0 0.0
    %533 = vmatprep.subr.mxu0 0.0
    %534 = vmatpush1.msra.mxu0 0.0
    %535 = vmatprep.subr.mxu0 0.0
    %536 = vmatpush1.msra.mxu0 0.0
    %537 = vmatprep.subr.mxu0 0.0
    %538 = vmatpush1.msra.mxu0 0.0
    %539 = vmatprep.subr.mxu0 0.0
    %540 = vmatpush1.msra.mxu0 0.0
    %541 = vmatprep.subr.mxu0 0.0
    %542 = vmatpush1.msra.mxu0 0.0
    %543 = vmatprep.subr.mxu0 0.0
    %544 = vmatpush1.msra.mxu0 0.0
    %545 = vmatprep.subr.mxu0 0.0
    %546 = vmatpush1.msra.mxu0 0.0
    %547 = vmatprep.subr.mxu0 0.0
    %548 = vmatpush1.msra.mxu0 0.0
    %549 = vmatprep.subr.mxu0 0.0
    %550 = vmatpush1.msra.mxu0 0.0
    %551 = vmatprep.subr.mxu0 0.0
    %552 = vmatpush1.msra.mxu0 0.0
    %553 = vmatprep.subr.mxu0 0.0
    %554 = vmatpush1.msra.mxu0 0.0
    %555 = vmatprep.subr.mxu0 0.0
    %556 = vmatpush1.msra.mxu0 0.0
    %557 = vmatprep.mubr.f32.mxu0 0.0
    %558 = vmatmul.mubr.f32.gmra.mrb[0].mxu0 %v40
    %v559 = vpop.f32.mrb[0].mxu0
    %v560 = vadd.f32 0.0, %v559
    %v561 = vpop.f32.mrb[0].mxu0
    %v562 = vadd.f32 0.0, %v561
    %563 = vmatprep.mubr.f32.mxu0 0.0
    %564 = vmatmul.mubr.f32.gmra.mrb[0].mxu0 %v41
    %v565 = vpop.f32.mrb[0].mxu0
    %v566 = vadd.f32 0.0, %v565
    %v567 = vpop.f32.mrb[0].mxu0
    %v568 = vadd.f32 0.0, %v567
    %569 = vmatprep.mubr.f32.mxu0 0.0
    %570 = vmatmul.mubr.f32.gmra.mrb[0].mxu0 %v42
    %v571 = vpop.f32.mrb[0].mxu0
    %v572 = vadd.f32 0.0, %v571
    %v573 = vpop.f32.mrb[0].mxu0
    %v574 = vadd.f32 0.0, %v573
    %575 = vmatprep.mubr.f32.mxu0 0.0
    %576 = vmatmul.mubr.f32.gmra.mrb[0].mxu0 %v43
    %v577 = vpop.f32.mrb[0].mxu0
    %v578 = vadd.f32 0.0, %v577
    %v579 = vpop.f32.mrb[0].mxu0
    %v580 = vadd.f32 0.0, %v579
    %581 = vmatprep.mubr.f32.mxu0 0.0
    %582 = vmatmul.mubr.f32.gmra.mrb[0].mxu0 %v44
    %v583 = vpop.f32.mrb[0].mxu0
    %v584 = vadd.f32 0.0, %v583
    %v585 = vpop.f32.mrb[0].mxu0
    %v586 = vadd.f32 0.0, %v585
    %587 = vmatprep.mubr.f32.mxu0 0.0
    %588 = vmatmul.mubr.f32.gmra.mrb[0].mxu0 %v45
    %v589 = vpop.f32.mrb[0].mxu0
    %v590 = vadd.f32 0.0, %v589
    %v591 = vpop.f32.mrb[0].mxu0
    %v592 = vadd.f32 0.0, %v591
    %593 = vdwg.mxu0
    %594 = vmatprep.subr.mxu0 0.0
    %595 = vmatpush1.msra.mxu0 %v54
    %596 = vmatprep.subr.mxu0 0.0
    %597 = vmatpush1.msra.mxu0 %v63
    %598 = vmatprep.subr.mxu0 0.0
    %599 = vmatpush1.msra.mxu0 %v72
    %600 = vmatprep.subr.mxu0 0.0
    %601 = vmatpush1.msra.mxu0 %v81
    %602 = vmatprep.subr.mxu0 0.0
    %603 = vmatpush1.msra.mxu0 %v90
    %604 = vmatprep.subr.mxu0 0.0
    %605 = vmatpush1.msra.mxu0 %v99
    %606 = vmatprep.subr.mxu0 0.0
    %607 = vmatpush1.msra.mxu0 %v108
    %608 = vmatprep.subr.mxu0 0.0
    %609 = vmatpush1.msra.mxu0 %v117
    %610 = vmatprep.subr.mxu0 0.0
    %611 = vmatpush1.msra.mxu0 %v126
    %612 = vmatprep.subr.mxu0 0.0
    %613 = vmatpush1.msra.mxu0 %v135
    %614 = vmatprep.subr.mxu0 0.0
    %615 = vmatpush1.msra.mxu0 %v144
    %616 = vmatprep.subr.mxu0 0.0
    %617 = vmatpush1.msra.mxu0 %v153
    %618 = vmatprep.subr.mxu0 0.0
    %619 = vmatpush1.msra.mxu0 %v162
    %620 = vmatprep.subr.mxu0 0.0
    %621 = vmatpush1.msra.mxu0 %v171
    %622 = vmatprep.subr.mxu0 0.0
    %623 = vmatpush1.msra.mxu0 %v180
    %624 = vmatprep.subr.mxu0 0.0
    %625 = vmatpush1.msra.mxu0 %v189
    %626 = vmatprep.subr.mxu0 0.0
    %627 = vmatpush1.msra.mxu0 0.0
    %628 = vmatprep.subr.mxu0 0.0
    %629 = vmatpush1.msra.mxu0 0.0
    %630 = vmatprep.subr.mxu0 0.0
    %631 = vmatpush1.msra.mxu0 0.0
    %632 = vmatprep.subr.mxu0 0.0
    %633 = vmatpush1.msra.mxu0 0.0
    %634 = vmatprep.subr.mxu0 0.0
    %635 = vmatpush1.msra.mxu0 0.0
    %636 = vmatprep.subr.mxu0 0.0
    %637 = vmatpush1.msra.mxu0 0.0
    %638 = vmatprep.subr.mxu0 0.0
    %639 = vmatpush1.msra.mxu0 0.0
    %640 = vmatprep.subr.mxu0 0.0
    %641 = vmatpush1.msra.mxu0 0.0
    %642 = vmatprep.subr.mxu0 0.0
    %643 = vmatpush1.msra.mxu0 0.0
    %644 = vmatprep.subr.mxu0 0.0
    %645 = vmatpush1.msra.mxu0 0.0
    %646 = vmatprep.subr.mxu0 0.0
    %647 = vmatpush1.msra.mxu0 0.0
    %648 = vmatprep.subr.mxu0 0.0
    %649 = vmatpush1.msra.mxu0 0.0
    %650 = vmatprep.subr.mxu0 0.0
    %651 = vmatpush1.msra.mxu0 0.0
    %652 = vmatprep.subr.mxu0 0.0
    %653 = vmatpush1.msra.mxu0 0.0
    %654 = vmatprep.subr.mxu0 0.0
    %655 = vmatpush1.msra.mxu0 0.0
    %656 = vmatprep.subr.mxu0 0.0
    %657 = vmatpush1.msra.mxu0 0.0
    %658 = vmatprep.mubr.f32.mxu0 0.0
    %659 = vmatmul.mubr.f32.gmra.mrb[0].mxu0 %v40
    %v660 = vpop.f32.mrb[0].mxu0
    %v661 = vadd.f32 0.0, %v660
    %v662 = vpop.f32.mrb[0].mxu0
    %663 = vmatprep.mubr.f32.mxu0 0.0
    %664 = vmatmul.mubr.f32.gmra.mrb[0].mxu0 %v41
    %v665 = vpop.f32.mrb[0].mxu0
    %v666 = vadd.f32 0.0, %v665
    %v667 = vpop.f32.mrb[0].mxu0
    %668 = vmatprep.mubr.f32.mxu0 0.0
    %669 = vmatmul.mubr.f32.gmra.mrb[0].mxu0 %v42
    %v670 = vpop.f32.mrb[0].mxu0
    %v671 = vadd.f32 0.0, %v670
    %v672 = vpop.f32.mrb[0].mxu0
    %673 = vmatprep.mubr.f32.mxu0 0.0
    %674 = vmatmul.mubr.f32.gmra.mrb[0].mxu0 %v43
    %v675 = vpop.f32.mrb[0].mxu0
    %v676 = vadd.f32 0.0, %v675
    %v677 = vpop.f32.mrb[0].mxu0
    %678 = vmatprep.mubr.f32.mxu0 0.0
    %679 = vmatmul.mubr.f32.gmra.mrb[0].mxu0 %v44
    %v680 = vpop.f32.mrb[0].mxu0
    %v681 = vadd.f32 0.0, %v680
    %v682 = vpop.f32.mrb[0].mxu0
    %683 = vmatprep.mubr.f32.mxu0 0.0
    %684 = vmatmul.mubr.f32.gmra.mrb[0].mxu0 %v45
    %v685 = vpop.f32.mrb[0].mxu0
    %v686 = vadd.f32 0.0, %v685
    %v687 = vpop.f32.mrb[0].mxu0
    %688 = vdwg.mxu0
    %689 = vst [vmem:[#allocation2] sm:$0xff] %v257
    %690 = vst [vmem:[#allocation2 + $0x8] sm:$0xff] %v259
    %691 = vst [vmem:[#allocation2 + $0x10] sm:$0xff] %v358
    %692 = vst [vmem:[#allocation2 + $0x18] sm:$0xff] %v360
    %693 = vst [vmem:[#allocation2 + $0x20] sm:$0xff] %v459
    %694 = vst [vmem:[#allocation2 + $0x28] sm:$0xff] %v461
    %695 = vst [vmem:[#allocation2 + $0x30] sm:$0xff] %v560
    %696 = vst [vmem:[#allocation2 + $0x38] sm:$0xff] %v562
    %697 = vst [vmem:[#allocation2 + $0x40] sm:$0xff] %v661
    %698 = vst [vmem:[#allocation2 + $0x48] sm:$0xff] %v263
    %699 = vst [vmem:[#allocation2 + $0x50] sm:$0xff] %v265
    %700 = vst [vmem:[#allocation2 + $0x58] sm:$0xff] %v364
    %701 = vst [vmem:[#allocation2 + $0x60] sm:$0xff] %v366
    %702 = vst [vmem:[#allocation2 + $0x68] sm:$0xff] %v465
    %703 = vst [vmem:[#allocation2 + $0x70] sm:$0xff] %v467
    %704 = vst [vmem:[#allocation2 + $0x78] sm:$0xff] %v566
    %705 = vst [vmem:[#allocation2 + $0x80] sm:$0xff] %v568
    %706 = vst [vmem:[#allocation2 + $0x88] sm:$0xff] %v666
    %707 = vst [vmem:[#allocation2 + $0x90] sm:$0xff] %v269
    %708 = vst [vmem:[#allocation2 + $0x98] sm:$0xff] %v271
    %709 = vst [vmem:[#allocation2 + $0xa0] sm:$0xff] %v370
    %710 = vst [vmem:[#allocation2 + $0xa8] sm:$0xff] %v372
    %711 = vst [vmem:[#allocation2 + $0xb0] sm:$0xff] %v471
    %712 = vst [vmem:[#allocation2 + $0xb8] sm:$0xff] %v473
    %713 = vst [vmem:[#allocation2 + $0xc0] sm:$0xff] %v572
    %714 = vst [vmem:[#allocation2 + $0xc8] sm:$0xff] %v574
    %715 = vst [vmem:[#allocation2 + $0xd0] sm:$0xff] %v671
    %716 = vst [vmem:[#allocation2 + $0xd8] sm:$0xff] %v275
    %717 = vst [vmem:[#allocation2 + $0xe0] sm:$0xff] %v277
    %718 = vst [vmem:[#allocation2 + $0xe8] sm:$0xff] %v376
    %719 = vst [vmem:[#allocation2 + $0xf0] sm:$0xff] %v378
    %720 = vst [vmem:[#allocation2 + $0xf8] sm:$0xff] %v477
    %721 = vst [vmem:[#allocation2 + $0x100] sm:$0xff] %v479
    %722 = vst [vmem:[#allocation2 + $0x108] sm:$0xff] %v578
    %723 = vst [vmem:[#allocation2 + $0x110] sm:$0xff] %v580
    %724 = vst [vmem:[#allocation2 + $0x118] sm:$0xff] %v676
    %725 = vst [vmem:[#allocation2 + $0x120] sm:$0xff] %v281
    %726 = vst [vmem:[#allocation2 + $0x128] sm:$0xff] %v283
    %727 = vst [vmem:[#allocation2 + $0x130] sm:$0xff] %v382
    %728 = vst [vmem:[#allocation2 + $0x138] sm:$0xff] %v384
    %729 = vst [vmem:[#allocation2 + $0x140] sm:$0xff] %v483
    %730 = vst [vmem:[#allocation2 + $0x148] sm:$0xff] %v485
    %731 = vst [vmem:[#allocation2 + $0x150] sm:$0xff] %v584
    %732 = vst [vmem:[#allocation2 + $0x158] sm:$0xff] %v586
    %733 = vst [vmem:[#allocation2 + $0x160] sm:$0xff] %v681
    %734 = vst [vmem:[#allocation2 + $0x168] sm:$0xff] %v287
    %735 = vst [vmem:[#allocation2 + $0x170] sm:$0xff] %v289
    %736 = vst [vmem:[#allocation2 + $0x178] sm:$0xff] %v388
    %737 = vst [vmem:[#allocation2 + $0x180] sm:$0xff] %v390
    %738 = vst [vmem:[#allocation2 + $0x188] sm:$0xff] %v489
    %739 = vst [vmem:[#allocation2 + $0x190] sm:$0xff] %v491
    %740 = vst [vmem:[#allocation2 + $0x198] sm:$0xff] %v590
    %741 = vst [vmem:[#allocation2 + $0x1a0] sm:$0xff] %v592
    %742 = vst [vmem:[#allocation2 + $0x1a8] sm:$0xff] %v686
    %v743 = vld [vmem:[#allocation2] sm:$0xfe]
    %v744 = vld [vmem:[#allocation2 + $0x48] sm:$0xff]
    %v745 = vld [vmem:[#allocation2 + $0x90] sm:$0x1]
    %v746 = vld [vmem:[#allocation2 + $0x8] sm:$0xff]
    %v747 = vld [vmem:[#allocation2 + $0x50] sm:$0xff]
    %v748 = vld [vmem:[#allocation2 + $0x98] sm:$0xff]
    %v749 = vand.u32 2147483647, %v746
    %v750 = vand.u32 2147483647, %v747
    %v751 = vand.u32 2147483647, %v748
    %v752 = vld [vmem:[#allocation2 + $0x10] sm:$0xff]
    %v753 = vld [vmem:[#allocation2 + $0x58] sm:$0xff]
    %v754 = vld [vmem:[#allocation2 + $0xa0] sm:$0xff]
    %v755 = vand.u32 2147483647, %v752
    %v756 = vand.u32 2147483647, %v753
    %v757 = vand.u32 2147483647, %v754
    %v758 = vmax.f32 %v749, %v755
    %v759 = vmax.f32 %v750, %v756
    %v760 = vmax.f32 %v751, %v757
    %v761 = vld [vmem:[#allocation2 + $0x18] sm:$0xff]
    %v762 = vld [vmem:[#allocation2 + $0x60] sm:$0xff]
    %v763 = vld [vmem:[#allocation2 + $0xa8] sm:$0xff]
    %v764 = vand.u32 2147483647, %v761
    %v765 = vand.u32 2147483647, %v762
    %v766 = vand.u32 2147483647, %v763
    %v767 = vmax.f32 %v758, %v764
    %v768 = vmax.f32 %v759, %v765
    %v769 = vmax.f32 %v760, %v766
    %v770 = vld [vmem:[#allocation2 + $0x20] sm:$0xff]
    %v771 = vld [vmem:[#allocation2 + $0x68] sm:$0xff]
    %v772 = vld [vmem:[#allocation2 + $0xb0] sm:$0xff]
    %v773 = vand.u32 2147483647, %v770
    %v774 = vand.u32 2147483647, %v771
    %v775 = vand.u32 2147483647, %v772
    %v776 = vmax.f32 %v767, %v773
    %v777 = vmax.f32 %v768, %v774
    %v778 = vmax.f32 %v769, %v775
    %vm782 = vcmask 1046528
    %v783 = vrot.slane %v776, 1
    %v784 = vrot.slane %v777, 1
    %v785 = vsel %vm782, %v783, %v784
    %v786 = vrot.slane %v778, 1
    %v787 = vsel %vm782, %v784, %v786
    %v790 = vmax.f32 %v776, %v785
    %v791 = vmax.f32 %v777, %v787
    %vm792 = vcmask 1045504
    %v793 = vrot.slane %v776, 2
    %v794 = vrot.slane %v777, 2
    %v795 = vsel %vm792, %v793, %v794
    %v796 = vrot.slane %v778, 2
    %v797 = vsel %vm792, %v794, %v796
    %v800 = vmax.f32 %v790, %v795
    %v801 = vmax.f32 %v791, %v797
    %vm802 = vcmask 1044480
    %v803 = vrot.slane %v776, 3
    %v804 = vrot.slane %v777, 3
    %v805 = vsel %vm802, %v803, %v804
    %v806 = vrot.slane %v778, 3
    %v807 = vsel %vm802, %v804, %v806
    %v810 = vmax.f32 %v800, %v805
    %v811 = vmax.f32 %v801, %v807
    %v812 = vand.u32 2147483647, %v743
    %v813 = vand.u32 2147483647, %v744
    %v814 = vand.u32 2147483647, %v745
    %vm817 = vcmask 1040384
    %v818 = vrot.slane %v810, 7
    %v819 = vrot.slane %v811, 7
    %v820 = vsel %vm817, %v818, %v819
    %v824 = vmul.f32 %v812, %v818
    %v825 = vmul.f32 %v813, %v820
    %v826 = vmul.f32 %v814, %v819
    %v827 = vld [vmem:[#allocation2 + $0x28] sm:$0xff]
    %v828 = vld [vmem:[#allocation2 + $0x70] sm:$0xff]
    %v831 = vrot.slane %v746, 7
    %v832 = vrot.slane %v747, 7
    %v833 = vsel %vm817, %v831, %v832
    %v837 = vmul.f32 %v743, %v831
    %v838 = vmul.f32 %v744, %v833
    %v839 = vmul.f32 %v745, %v832
    %v840 = vsub.f32 %v837, %v824
    %v841 = vsub.f32 %v838, %v825
    %v842 = vsub.f32 %v839, %v826
    %v843 = vmul.f32 %v840, 1.442695
    %v844 = vpow.pop %v843
    %v845 = vmul.f32 %v841, 1.442695
    %v846 = vpow.pop %v845
    %v847 = vmul.f32 %v842, 1.442695
    %v848 = vpow.pop %v847
    %v851 = vrot.slane %v827, 7
    %v852 = vrot.slane %v828, 7
    %v853 = vsel %vm817, %v851, %v852
    %v857 = vmul.f32 %v844, %v851
    %v858 = vmul.f32 %v846, %v853
    %v859 = vmul.f32 %v848, %v852
    %v860 = vadd.f32 %v857, 0.0
    %v861 = vadd.f32 %v858, 0.0
    %v862 = vadd.f32 %v859, 0.0
    %v863 = vadd.f32 %v844, 0.0
    %v864 = vadd.f32 %v846, 0.0
    %v865 = vadd.f32 %v848, 0.0
    %v866 = vld [vmem:[#allocation2 + $0x30] sm:$0xff]
    %v867 = vld [vmem:[#allocation2 + $0x78] sm:$0xff]
    %v870 = vrot.slane %v752, 7
    %v871 = vrot.slane %v753, 7
    %v872 = vsel %vm817, %v870, %v871
    %v876 = vmul.f32 %v743, %v870
    %v877 = vmul.f32 %v744, %v872
    %v878 = vmul.f32 %v745, %v871
    %v879 = vsub.f32 %v876, %v824
    %v880 = vsub.f32 %v877, %v825
    %v881 = vsub.f32 %v878, %v826
    %v882 = vmul.f32 %v879, 1.442695
    %v883 = vpow.pop %v882
    %v884 = vmul.f32 %v880, 1.442695
    %v885 = vpow.pop %v884
    %v886 = vmul.f32 %v881, 1.442695
    %v887 = vpow.pop %v886
    %v890 = vrot.slane %v866, 7
    %v891 = vrot.slane %v867, 7
    %v892 = vsel %vm817, %v890, %v891
    %v896 = vmul.f32 %v883, %v890
    %v897 = vmul.f32 %v885, %v892
    %v898 = vmul.f32 %v887, %v891
    %v899 = vadd.f32 %v860, %v896
    %v900 = vadd.f32 %v861, %v897
    %v901 = vadd.f32 %v862, %v898
    %v902 = vadd.f32 %v863, %v883
    %v903 = vadd.f32 %v864, %v885
    %v904 = vadd.f32 %v865, %v887
    %v905 = vld [vmem:[#allocation2 + $0x38] sm:$0xff]
    %v906 = vld [vmem:[#allocation2 + $0x80] sm:$0xff]
    %v909 = vrot.slane %v761, 7
    %v910 = vrot.slane %v762, 7
    %v911 = vsel %vm817, %v909, %v910
    %v915 = vmul.f32 %v743, %v909
    %v916 = vmul.f32 %v744, %v911
    %v917 = vmul.f32 %v745, %v910
    %v918 = vsub.f32 %v915, %v824
    %v919 = vsub.f32 %v916, %v825
    %v920 = vsub.f32 %v917, %v826
    %v921 = vmul.f32 %v918, 1.442695
    %v922 = vpow.pop %v921
    %v923 = vmul.f32 %v919, 1.442695
    %v924 = vpow.pop %v923
    %v925 = vmul.f32 %v920, 1.442695
    %v926 = vpow.pop %v925
    %v929 = vrot.slane %v905, 7
    %v930 = vrot.slane %v906, 7
    %v931 = vsel %vm817, %v929, %v930
    %v935 = vmul.f32 %v922, %v929
    %v936 = vmul.f32 %v924, %v931
    %v937 = vmul.f32 %v926, %v930
    %v938 = vadd.f32 %v899, %v935
    %v939 = vadd.f32 %v900, %v936
    %v940 = vadd.f32 %v901, %v937
    %v941 = vadd.f32 %v902, %v922
    %v942 = vadd.f32 %v903, %v924
    %v943 = vadd.f32 %v904, %v926
    %v944 = vld [vmem:[#allocation2 + $0x40] sm:$0xff]
    %v945 = vld [vmem:[#allocation2 + $0x88] sm:$0xff]
    %v948 = vrot.slane %v770, 7
    %v949 = vrot.slane %v771, 7
    %v950 = vsel %vm817, %v948, %v949
    %v954 = vmul.f32 %v743, %v948
    %v955 = vmul.f32 %v744, %v950
    %v956 = vmul.f32 %v745, %v949
    %v957 = vsub.f32 %v954, %v824
    %v958 = vsub.f32 %v955, %v825
    %v959 = vsub.f32 %v956, %v826
    %v960 = vmul.f32 %v957, 1.442695
    %v961 = vpow.pop %v960
    %v962 = vmul.f32 %v958, 1.442695
    %v963 = vpow.pop %v962
    %v964 = vmul.f32 %v959, 1.442695
    %v965 = vpow.pop %v964
    %v968 = vrot.slane %v944, 7
    %v969 = vrot.slane %v945, 7
    %v970 = vsel %vm817, %v968, %v969
    %v974 = vmul.f32 %v961, %v968
    %v975 = vmul.f32 %v963, %v970
    %v976 = vmul.f32 %v965, %v969
    %v977 = vadd.f32 %v938, %v974
    %v978 = vadd.f32 %v939, %v975
    %v979 = vadd.f32 %v940, %v976
    %v980 = vadd.f32 %v941, %v961
    %v981 = vadd.f32 %v942, %v963
    %v982 = vadd.f32 %v943, %v965
    %v983 = vld [vmem:[#allocation2 + $0x8] sm:$0xfe]
    %v984 = vld [vmem:[#allocation2 + $0x98] sm:$0x1]
    %v985 = vld [vmem:[#allocation2 + $0x28] sm:$0xfe]
    %v986 = vld [vmem:[#allocation2 + $0xb8] sm:$0x1]
    %v987 = vmul.f32 %v743, %v983
    %v988 = vmul.f32 %v744, %v747
    %v989 = vmul.f32 %v745, %v984
    %v990 = vsub.f32 %v987, %v824
    %v991 = vsub.f32 %v988, %v825
    %v992 = vsub.f32 %v989, %v826
    %v993 = vmul.f32 %v990, 1.442695
    %v994 = vpow.pop %v993
    %v995 = vmul.f32 %v991, 1.442695
    %v996 = vpow.pop %v995
    %v997 = vmul.f32 %v992, 1.442695
    %v998 = vpow.pop %v997
    %v999 = vmul.f32 %v994, %v985
    %v1000 = vmul.f32 %v996, %v828
    %v1001 = vmul.f32 %v998, %v986
    %v1002 = vadd.f32 %v977, %v999
    %v1003 = vadd.f32 %v978, %v1000
    %v1004 = vadd.f32 %v979, %v1001
    %v1005 = vadd.f32 %v980, %v994
    %v1006 = vadd.f32 %v981, %v996
    %v1007 = vadd.f32 %v982, %v998
    %v1008 = vld [vmem:[#allocation2 + $0x10] sm:$0xfe]
    %v1009 = vld [vmem:[#allocation2 + $0xa0] sm:$0x1]
    %v1010 = vld [vmem:[#allocation2 + $0x30] sm:$0xfe]
    %v1011 = vld [vmem:[#allocation2 + $0xc0] sm:$0x1]
    %v1012 = vmul.f32 %v743, %v1008
    %v1013 = vmul.f32 %v744, %v753
    %v1014 = vmul.f32 %v745, %v1009
    %v1015 = vsub.f32 %v1012, %v824
    %v1016 = vsub.f32 %v1013, %v825
    %v1017 = vsub.f32 %v1014, %v826
    %v1018 = vmul.f32 %v1015, 1.442695
    %v1019 = vpow.pop %v1018
    %v1020 = vmul.f32 %v1016, 1.442695
    %v1021 = vpow.pop %v1020
    %v1022 = vmul.f32 %v1017, 1.442695
    %v1023 = vpow.pop %v1022
    %v1024 = vmul.f32 %v1019, %v1010
    %v1025 = vmul.f32 %v1021, %v867
    %v1026 = vmul.f32 %v1023, %v1011
    %v1027 = vadd.f32 %v1002, %v1024
    %v1028 = vadd.f32 %v1003, %v1025
    %v1029 = vadd.f32 %v1004, %v1026
    %v1030 = vadd.f32 %v1005, %v1019
    %v1031 = vadd.f32 %v1006, %v1021
    %v1032 = vadd.f32 %v1007, %v1023
    %v1033 = vld [vmem:[#allocation2 + $0x18] sm:$0xfe]
    %v1034 = vld [vmem:[#allocation2 + $0xa8] sm:$0x1]
    %v1035 = vld [vmem:[#allocation2 + $0x38] sm:$0xfe]
    %v1036 = vld [vmem:[#allocation2 + $0xc8] sm:$0x1]
    %v1037 = vmul.f32 %v743, %v1033
    %v1038 = vmul.f32 %v744, %v762
    %v1039 = vmul.f32 %v745, %v1034
    %v1040 = vsub.f32 %v1037, %v824
    %v1041 = vsub.f32 %v1038, %v825
    %v1042 = vsub.f32 %v1039, %v826
    %v1043 = vmul.f32 %v1040, 1.442695
    %v1044 = vpow.pop %v1043
    %v1045 = vmul.f32 %v1041, 1.442695
    %v1046 = vpow.pop %v1045
    %v1047 = vmul.f32 %v1042, 1.442695
    %v1048 = vpow.pop %v1047
    %v1049 = vmul.f32 %v1044, %v1035
    %v1050 = vmul.f32 %v1046, %v906
    %v1051 = vmul.f32 %v1048, %v1036
    %v1052 = vadd.f32 %v1027, %v1049
    %v1053 = vadd.f32 %v1028, %v1050
    %v1054 = vadd.f32 %v1029, %v1051
    %v1055 = vadd.f32 %v1030, %v1044
    %v1056 = vadd.f32 %v1031, %v1046
    %v1057 = vadd.f32 %v1032, %v1048
    %v1058 = vld [vmem:[#allocation2 + $0x20] sm:$0xfe]
    %v1059 = vld [vmem:[#allocation2 + $0xb0] sm:$0x1]
    %v1060 = vld [vmem:[#allocation2 + $0x40] sm:$0xfe]
    %v1061 = vld [vmem:[#allocation2 + $0xd0] sm:$0x1]
    %v1062 = vmul.f32 %v743, %v1058
    %v1063 = vmul.f32 %v744, %v771
    %v1064 = vmul.f32 %v745, %v1059
    %v1065 = vsub.f32 %v1062, %v824
    %v1066 = vsub.f32 %v1063, %v825
    %v1067 = vsub.f32 %v1064, %v826
    %v1068 = vmul.f32 %v1065, 1.442695
    %v1069 = vpow.pop %v1068
    %v1070 = vmul.f32 %v1066, 1.442695
    %v1071 = vpow.pop %v1070
    %v1072 = vmul.f32 %v1067, 1.442695
    %v1073 = vpow.pop %v1072
    %v1074 = vmul.f32 %v1069, %v1060
    %v1075 = vmul.f32 %v1071, %v945
    %v1076 = vmul.f32 %v1073, %v1061
    %v1077 = vadd.f32 %v1052, %v1074
    %v1078 = vadd.f32 %v1053, %v1075
    %v1079 = vadd.f32 %v1054, %v1076
    %v1080 = vadd.f32 %v1055, %v1069
    %v1081 = vadd.f32 %v1056, %v1071
    %v1082 = vadd.f32 %v1057, %v1073
    %v1083 = vld [vmem:[#allocation2 + $0x8] sm:$0xfc]
    %v1084 = vld [vmem:[#allocation2 + $0x98] sm:$0x3]
    %v1085 = vld [vmem:[#allocation2 + $0x28] sm:$0xfc]
    %v1086 = vld [vmem:[#allocation2 + $0xb8] sm:$0x3]
    %v1089 = vrot.slane %v1083, 1
    %v1090 = vrot.slane %v747, 1
    %v1091 = vsel %vm782, %v1089, %v1090
    %v1092 = vrot.slane %v1084, 1
    %v1093 = vsel %vm782, %v1090, %v1092
    %v1097 = vmul.f32 %v743, %v1091
    %v1098 = vmul.f32 %v744, %v1093
    %v1099 = vmul.f32 %v745, %v1092
    %v1100 = vsub.f32 %v1097, %v824
    %v1101 = vsub.f32 %v1098, %v825
    %v1102 = vsub.f32 %v1099, %v826
    %v1103 = vmul.f32 %v1100, 1.442695
    %v1104 = vpow.pop %v1103
    %v1105 = vmul.f32 %v1101, 1.442695
    %v1106 = vpow.pop %v1105
    %v1107 = vmul.f32 %v1102, 1.442695
    %v1108 = vpow.pop %v1107
    %v1111 = vrot.slane %v1085, 1
    %v1112 = vrot.slane %v828, 1
    %v1113 = vsel %vm782, %v1111, %v1112
    %v1114 = vrot.slane %v1086, 1
    %v1115 = vsel %vm782, %v1112, %v1114
    %v1119 = vmul.f32 %v1104, %v1113
    %v1120 = vmul.f32 %v1106, %v1115
    %v1121 = vmul.f32 %v1108, %v1114
    %v1122 = vadd.f32 %v1077, %v1119
    %v1123 = vadd.f32 %v1078, %v1120
    %v1124 = vadd.f32 %v1079, %v1121
    %v1125 = vadd.f32 %v1080, %v1104
    %v1126 = vadd.f32 %v1081, %v1106
    %v1127 = vadd.f32 %v1082, %v1108
    %v1128 = vld [vmem:[#allocation2 + $0x10] sm:$0xfc]
    %v1129 = vld [vmem:[#allocation2 + $0xa0] sm:$0x3]
    %v1130 = vld [vmem:[#allocation2 + $0x30] sm:$0xfc]
    %v1131 = vld [vmem:[#allocation2 + $0xc0] sm:$0x3]
    %v1134 = vrot.slane %v1128, 1
    %v1135 = vrot.slane %v753, 1
    %v1136 = vsel %vm782, %v1134, %v1135
    %v1137 = vrot.slane %v1129, 1
    %v1138 = vsel %vm782, %v1135, %v1137
    %v1142 = vmul.f32 %v743, %v1136
    %v1143 = vmul.f32 %v744, %v1138
    %v1144 = vmul.f32 %v745, %v1137
    %v1145 = vsub.f32 %v1142, %v824
    %v1146 = vsub.f32 %v1143, %v825
    %v1147 = vsub.f32 %v1144, %v826
    %v1148 = vmul.f32 %v1145, 1.442695
    %v1149 = vpow.pop %v1148
    %v1150 = vmul.f32 %v1146, 1.442695
    %v1151 = vpow.pop %v1150
    %v1152 = vmul.f32 %v1147, 1.442695
    %v1153 = vpow.pop %v1152
    %v1156 = vrot.slane %v1130, 1
    %v1157 = vrot.slane %v867, 1
    %v1158 = vsel %vm782, %v1156, %v1157
    %v1159 = vrot.slane %v1131, 1
    %v1160 = vsel %vm782, %v1157, %v1159
    %v1164 = vmul.f32 %v1149, %v1158
    %v1165 = vmul.f32 %v1151, %v1160
    %v1166 = vmul.f32 %v1153, %v1159
    %v1167 = vadd.f32 %v1122, %v1164
    %v1168 = vadd.f32 %v1123, %v1165
    %v1169 = vadd.f32 %v1124, %v1166
    %v1170 = vadd.f32 %v1125, %v1149
    %v1171 = vadd.f32 %v1126, %v1151
    %v1172 = vadd.f32 %v1127, %v1153
    %v1173 = vld [vmem:[#allocation2 + $0x18] sm:$0xfc]
    %v1174 = vld [vmem:[#allocation2 + $0xa8] sm:$0x3]
    %v1175 = vld [vmem:[#allocation2 + $0x38] sm:$0xfc]
    %v1176 = vld [vmem:[#allocation2 + $0xc8] sm:$0x3]
    %v1179 = vrot.slane %v1173, 1
    %v1180 = vrot.slane %v762, 1
    %v1181 = vsel %vm782, %v1179, %v1180
    %v1182 = vrot.slane %v1174, 1
    %v1183 = vsel %vm782, %v1180, %v1182
    %v1187 = vmul.f32 %v743, %v1181
    %v1188 = vmul.f32 %v744, %v1183
    %v1189 = vmul.f32 %v745, %v1182
    %v1190 = vsub.f32 %v1187, %v824
    %v1191 = vsub.f32 %v1188, %v825
    %v1192 = vsub.f32 %v1189, %v826
    %v1193 = vmul.f32 %v1190, 1.442695
    %v1194 = vpow.pop %v1193
    %v1195 = vmul.f32 %v1191, 1.442695
    %v1196 = vpow.pop %v1195
    %v1197 = vmul.f32 %v1192, 1.442695
    %v1198 = vpow.pop %v1197
    %v1201 = vrot.slane %v1175, 1
    %v1202 = vrot.slane %v906, 1
    %v1203 = vsel %vm782, %v1201, %v1202
    %v1204 = vrot.slane %v1176, 1
    %v1205 = vsel %vm782, %v1202, %v1204
    %v1209 = vmul.f32 %v1194, %v1203
    %v1210 = vmul.f32 %v1196, %v1205
    %v1211 = vmul.f32 %v1198, %v1204
    %v1212 = vadd.f32 %v1167, %v1209
    %v1213 = vadd.f32 %v1168, %v1210
    %v1214 = vadd.f32 %v1169, %v1211
    %v1215 = vadd.f32 %v1170, %v1194
    %v1216 = vadd.f32 %v1171, %v1196
    %v1217 = vadd.f32 %v1172, %v1198
    %v1218 = vld [vmem:[#allocation2 + $0x20] sm:$0xfc]
    %v1219 = vld [vmem:[#allocation2 + $0xb0] sm:$0x3]
    %v1220 = vld [vmem:[#allocation2 + $0x40] sm:$0xfc]
    %v1221 = vld [vmem:[#allocation2 + $0xd0] sm:$0x3]
    %v1224 = vrot.slane %v1218, 1
    %v1225 = vrot.slane %v771, 1
    %v1226 = vsel %vm782, %v1224, %v1225
    %v1227 = vrot.slane %v1219, 1
    %v1228 = vsel %vm782, %v1225, %v1227
    %v1232 = vmul.f32 %v743, %v1226
    %v1233 = vmul.f32 %v744, %v1228
    %v1234 = vmul.f32 %v745, %v1227
    %v1235 = vsub.f32 %v1232, %v824
    %v1236 = vsub.f32 %v1233, %v825
    %v1237 = vsub.f32 %v1234, %v826
    %v1238 = vmul.f32 %v1235, 1.442695
    %v1239 = vpow.pop %v1238
    %v1240 = vmul.f32 %v1236, 1.442695
    %v1241 = vpow.pop %v1240
    %v1242 = vmul.f32 %v1237, 1.442695
    %v1243 = vpow.pop %v1242
    %v1246 = vrot.slane %v1220, 1
    %v1247 = vrot.slane %v945, 1
    %v1248 = vsel %vm782, %v1246, %v1247
    %v1249 = vrot.slane %v1221, 1
    %v1250 = vsel %vm782, %v1247, %v1249
    %v1254 = vmul.f32 %v1239, %v1248
    %v1255 = vmul.f32 %v1241, %v1250
    %v1256 = vmul.f32 %v1243, %v1249
    %v1257 = vadd.f32 %v1212, %v1254
    %v1258 = vadd.f32 %v1213, %v1255
    %v1259 = vadd.f32 %v1214, %v1256
    %v1260 = vadd.f32 %v1215, %v1239
    %v1261 = vadd.f32 %v1216, %v1241
    %v1262 = vadd.f32 %v1217, %v1243
    %v1263 = vld [vmem:[#allocation2 + $0x8] sm:$0xf8]
    %v1264 = vld [vmem:[#allocation2 + $0x98] sm:$0x7]
    %v1265 = vld [vmem:[#allocation2 + $0x28] sm:$0xf8]
    %v1266 = vld [vmem:[#allocation2 + $0xb8] sm:$0x7]
    %v1269 = vrot.slane %v1263, 2
    %v1270 = vrot.slane %v747, 2
    %v1271 = vsel %vm792, %v1269, %v1270
    %v1272 = vrot.slane %v1264, 2
    %v1273 = vsel %vm792, %v1270, %v1272
    %v1277 = vmul.f32 %v743, %v1271
    %v1278 = vmul.f32 %v744, %v1273
    %v1279 = vmul.f32 %v745, %v1272
    %v1280 = vsub.f32 %v1277, %v824
    %v1281 = vsub.f32 %v1278, %v825
    %v1282 = vsub.f32 %v1279, %v826
    %v1283 = vmul.f32 %v1280, 1.442695
    %v1284 = vpow.pop %v1283
    %v1285 = vmul.f32 %v1281, 1.442695
    %v1286 = vpow.pop %v1285
    %v1287 = vmul.f32 %v1282, 1.442695
    %v1288 = vpow.pop %v1287
    %v1291 = vrot.slane %v1265, 2
    %v1292 = vrot.slane %v828, 2
    %v1293 = vsel %vm792, %v1291, %v1292
    %v1294 = vrot.slane %v1266, 2
    %v1295 = vsel %vm792, %v1292, %v1294
    %v1299 = vmul.f32 %v1284, %v1293
    %v1300 = vmul.f32 %v1286, %v1295
    %v1301 = vmul.f32 %v1288, %v1294
    %v1302 = vadd.f32 %v1257, %v1299
    %v1303 = vadd.f32 %v1258, %v1300
    %v1304 = vadd.f32 %v1259, %v1301
    %v1305 = vadd.f32 %v1260, %v1284
    %v1306 = vadd.f32 %v1261, %v1286
    %v1307 = vadd.f32 %v1262, %v1288
    %v1308 = vld [vmem:[#allocation2 + $0x10] sm:$0xf8]
    %v1309 = vld [vmem:[#allocation2 + $0xa0] sm:$0x7]
    %v1310 = vld [vmem:[#allocation2 + $0x30] sm:$0xf8]
    %v1311 = vld [vmem:[#allocation2 + $0xc0] sm:$0x7]
    %v1314 = vrot.slane %v1308, 2
    %v1315 = vrot.slane %v753, 2
    %v1316 = vsel %vm792, %v1314, %v1315
    %v1317 = vrot.slane %v1309, 2
    %v1318 = vsel %vm792, %v1315, %v1317
    %v1322 = vmul.f32 %v743, %v1316
    %v1323 = vmul.f32 %v744, %v1318
    %v1324 = vmul.f32 %v745, %v1317
    %v1325 = vsub.f32 %v1322, %v824
    %v1326 = vsub.f32 %v1323, %v825
    %v1327 = vsub.f32 %v1324, %v826
    %v1328 = vmul.f32 %v1325, 1.442695
    %v1329 = vpow.pop %v1328
    %v1330 = vmul.f32 %v1326, 1.442695
    %v1331 = vpow.pop %v1330
    %v1332 = vmul.f32 %v1327, 1.442695
    %v1333 = vpow.pop %v1332
    %v1336 = vrot.slane %v1310, 2
    %v1337 = vrot.slane %v867, 2
    %v1338 = vsel %vm792, %v1336, %v1337
    %v1339 = vrot.slane %v1311, 2
    %v1340 = vsel %vm792, %v1337, %v1339
    %v1344 = vmul.f32 %v1329, %v1338
    %v1345 = vmul.f32 %v1331, %v1340
    %v1346 = vmul.f32 %v1333, %v1339
    %v1347 = vadd.f32 %v1302, %v1344
    %v1348 = vadd.f32 %v1303, %v1345
    %v1349 = vadd.f32 %v1304, %v1346
    %v1350 = vadd.f32 %v1305, %v1329
    %v1351 = vadd.f32 %v1306, %v1331
    %v1352 = vadd.f32 %v1307, %v1333
    %v1353 = vld [vmem:[#allocation2 + $0x18] sm:$0xf8]
    %v1354 = vld [vmem:[#allocation2 + $0xa8] sm:$0x7]
    %v1355 = vld [vmem:[#allocation2 + $0x38] sm:$0xf8]
    %v1356 = vld [vmem:[#allocation2 + $0xc8] sm:$0x7]
    %v1359 = vrot.slane %v1353, 2
    %v1360 = vrot.slane %v762, 2
    %v1361 = vsel %vm792, %v1359, %v1360
    %v1362 = vrot.slane %v1354, 2
    %v1363 = vsel %vm792, %v1360, %v1362
    %v1367 = vmul.f32 %v743, %v1361
    %v1368 = vmul.f32 %v744, %v1363
    %v1369 = vmul.f32 %v745, %v1362
    %v1370 = vsub.f32 %v1367, %v824
    %v1371 = vsub.f32 %v1368, %v825
    %v1372 = vsub.f32 %v1369, %v826
    %v1373 = vmul.f32 %v1370, 1.442695
    %v1374 = vpow.pop %v1373
    %v1375 = vmul.f32 %v1371, 1.442695
    %v1376 = vpow.pop %v1375
    %v1377 = vmul.f32 %v1372, 1.442695
    %v1378 = vpow.pop %v1377
    %v1381 = vrot.slane %v1355, 2
    %v1382 = vrot.slane %v906, 2
    %v1383 = vsel %vm792, %v1381, %v1382
    %v1384 = vrot.slane %v1356, 2
    %v1385 = vsel %vm792, %v1382, %v1384
    %v1389 = vmul.f32 %v1374, %v1383
    %v1390 = vmul.f32 %v1376, %v1385
    %v1391 = vmul.f32 %v1378, %v1384
    %v1392 = vadd.f32 %v1347, %v1389
    %v1393 = vadd.f32 %v1348, %v1390
    %v1394 = vadd.f32 %v1349, %v1391
    %v1395 = vadd.f32 %v1350, %v1374
    %v1396 = vadd.f32 %v1351, %v1376
    %v1397 = vadd.f32 %v1352, %v1378
    %v1398 = vld [vmem:[#allocation2 + $0x20] sm:$0xf8]
    %v1399 = vld [vmem:[#allocation2 + $0xb0] sm:$0x7]
    %v1400 = vld [vmem:[#allocation2 + $0x40] sm:$0xf8]
    %v1401 = vld [vmem:[#allocation2 + $0xd0] sm:$0x7]
    %v1404 = vrot.slane %v1398, 2
    %v1405 = vrot.slane %v771, 2
    %v1406 = vsel %vm792, %v1404, %v1405
    %v1407 = vrot.slane %v1399, 2
    %v1408 = vsel %vm792, %v1405, %v1407
    %v1412 = vmul.f32 %v743, %v1406
    %v1413 = vmul.f32 %v744, %v1408
    %v1414 = vmul.f32 %v745, %v1407
    %v1415 = vsub.f32 %v1412, %v824
    %v1416 = vsub.f32 %v1413, %v825
    %v1417 = vsub.f32 %v1414, %v826
    %v1418 = vmul.f32 %v1415, 1.442695
    %v1419 = vpow.pop %v1418
    %v1420 = vmul.f32 %v1416, 1.442695
    %v1421 = vpow.pop %v1420
    %v1422 = vmul.f32 %v1417, 1.442695
    %v1423 = vpow.pop %v1422
    %v1426 = vrot.slane %v1400, 2
    %v1427 = vrot.slane %v945, 2
    %v1428 = vsel %vm792, %v1426, %v1427
    %v1429 = vrot.slane %v1401, 2
    %v1430 = vsel %vm792, %v1427, %v1429
    %v1434 = vmul.f32 %v1419, %v1428
    %v1435 = vmul.f32 %v1421, %v1430
    %v1436 = vmul.f32 %v1423, %v1429
    %v1437 = vadd.f32 %v1392, %v1434
    %v1438 = vadd.f32 %v1393, %v1435
    %v1439 = vadd.f32 %v1394, %v1436
    %v1440 = vadd.f32 %v1395, %v1419
    %v1441 = vadd.f32 %v1396, %v1421
    %v1442 = vadd.f32 %v1397, %v1423
    %v1443 = vrcp.pop %v1440
    %v1444 = vrcp.pop %v1441
    %v1445 = vrcp.pop %v1442
    %v1446 = vmul.f32 %v1440, %v1443
    %v1447 = vmul.f32 %v1441, %v1444
    %v1448 = vmul.f32 %v1442, %v1445
    %v1449 = vsub.f32 2.0, %v1446
    %v1450 = vsub.f32 2.0, %v1447
    %v1451 = vsub.f32 2.0, %v1448
    %v1452 = vmul.f32 %v1443, %v1449
    %v1453 = vmul.f32 %v1444, %v1450
    %v1454 = vmul.f32 %v1445, %v1451
    %v1455 = vmul.f32 %v1437, %v1452
    %v1456 = vmul.f32 %v1438, %v1453
    %v1457 = vmul.f32 %v1439, %v1454
    %1458 = vst [vmem:[#allocation8 - $0x1] sm:$0xfe] %v1455
    %1459 = vst [vmem:[#allocation8 + $0x7] sm:$0xff] %v1456
    %1460 = vst [vmem:[#allocation8 + $0xf] sm:$0x1] %v1457
    %v1461 = vld [vmem:[#allocation2 + $0xd8] sm:$0xfe]
    %v1462 = vld [vmem:[#allocation2 + $0x120] sm:$0xff]
    %v1463 = vld [vmem:[#allocation2 + $0x168] sm:$0x1]
    %v1464 = vld [vmem:[#allocation2 + $0xe0] sm:$0xff]
    %v1465 = vld [vmem:[#allocation2 + $0x128] sm:$0xff]
    %v1466 = vld [vmem:[#allocation2 + $0x170] sm:$0xff]
    %v1467 = vand.u32 2147483647, %v1464
    %v1468 = vand.u32 2147483647, %v1465
    %v1469 = vand.u32 2147483647, %v1466
    %v1470 = vld [vmem:[#allocation2 + $0xe8] sm:$0xff]
    %v1471 = vld [vmem:[#allocation2 + $0x130] sm:$0xff]
    %v1472 = vld [vmem:[#allocation2 + $0x178] sm:$0xff]
    %v1473 = vand.u32 2147483647, %v1470
    %v1474 = vand.u32 2147483647, %v1471
    %v1475 = vand.u32 2147483647, %v1472
    %v1476 = vmax.f32 %v1467, %v1473
    %v1477 = vmax.f32 %v1468, %v1474
    %v1478 = vmax.f32 %v1469, %v1475
    %v1479 = vld [vmem:[#allocation2 + $0xf0] sm:$0xff]
    %v1480 = vld [vmem:[#allocation2 + $0x138] sm:$0xff]
    %v1481 = vld [vmem:[#allocation2 + $0x180] sm:$0xff]
    %v1482 = vand.u32 2147483647, %v1479
    %v1483 = vand.u32 2147483647, %v1480
    %v1484 = vand.u32 2147483647, %v1481
    %v1485 = vmax.f32 %v1476, %v1482
    %v1486 = vmax.f32 %v1477, %v1483
    %v1487 = vmax.f32 %v1478, %v1484
    %v1488 = vld [vmem:[#allocation2 + $0xf8] sm:$0xff]
    %v1489 = vld [vmem:[#allocation2 + $0x140] sm:$0xff]
    %v1490 = vld [vmem:[#allocation2 + $0x188] sm:$0xff]
    %v1491 = vand.u32 2147483647, %v1488
    %v1492 = vand.u32 2147483647, %v1489
    %v1493 = vand.u32 2147483647, %v1490
    %v1494 = vmax.f32 %v1485, %v1491
    %v1495 = vmax.f32 %v1486, %v1492
    %v1496 = vmax.f32 %v1487, %v1493
    %v1500 = vrot.slane %v1494, 1
    %v1501 = vrot.slane %v1495, 1
    %v1502 = vsel %vm782, %v1500, %v1501
    %v1503 = vrot.slane %v1496, 1
    %v1504 = vsel %vm782, %v1501, %v1503
    %v1507 = vmax.f32 %v1494, %v1502
    %v1508 = vmax.f32 %v1495, %v1504
    %v1509 = vrot.slane %v1494, 2
    %v1510 = vrot.slane %v1495, 2
    %v1511 = vsel %vm792, %v1509, %v1510
    %v1512 = vrot.slane %v1496, 2
    %v1513 = vsel %vm792, %v1510, %v1512
    %v1516 = vmax.f32 %v1507, %v1511
    %v1517 = vmax.f32 %v1508, %v1513
    %v1518 = vrot.slane %v1494, 3
    %v1519 = vrot.slane %v1495, 3
    %v1520 = vsel %vm802, %v1518, %v1519
    %v1521 = vrot.slane %v1496, 3
    %v1522 = vsel %vm802, %v1519, %v1521
    %v1525 = vmax.f32 %v1516, %v1520
    %v1526 = vmax.f32 %v1517, %v1522
    %v1527 = vand.u32 2147483647, %v1461
    %v1528 = vand.u32 2147483647, %v1462
    %v1529 = vand.u32 2147483647, %v1463
    %v1532 = vrot.slane %v1525, 7
    %v1533 = vrot.slane %v1526, 7
    %v1534 = vsel %vm817, %v1532, %v1533
    %v1538 = vmul.f32 %v1527, %v1532
    %v1539 = vmul.f32 %v1528, %v1534
    %v1540 = vmul.f32 %v1529, %v1533
    %v1541 = vld [vmem:[#allocation2 + $0x100] sm:$0xff]
    %v1542 = vld [vmem:[#allocation2 + $0x148] sm:$0xff]
    %v1545 = vrot.slane %v1464, 7
    %v1546 = vrot.slane %v1465, 7
    %v1547 = vsel %vm817, %v1545, %v1546
    %v1551 = vmul.f32 %v1461, %v1545
    %v1552 = vmul.f32 %v1462, %v1547
    %v1553 = vmul.f32 %v1463, %v1546
    %v1554 = vsub.f32 %v1551, %v1538
    %v1555 = vsub.f32 %v1552, %v1539
    %v1556 = vsub.f32 %v1553, %v1540
    %v1557 = vmul.f32 %v1554, 1.442695
    %v1558 = vpow.pop %v1557
    %v1559 = vmul.f32 %v1555, 1.442695
    %v1560 = vpow.pop %v1559
    %v1561 = vmul.f32 %v1556, 1.442695
    %v1562 = vpow.pop %v1561
    %v1565 = vrot.slane %v1541, 7
    %v1566 = vrot.slane %v1542, 7
    %v1567 = vsel %vm817, %v1565, %v1566
    %v1571 = vmul.f32 %v1558, %v1565
    %v1572 = vmul.f32 %v1560, %v1567
    %v1573 = vmul.f32 %v1562, %v1566
    %v1574 = vadd.f32 %v1571, 0.0
    %v1575 = vadd.f32 %v1572, 0.0
    %v1576 = vadd.f32 %v1573, 0.0
    %v1577 = vadd.f32 %v1558, 0.0
    %v1578 = vadd.f32 %v1560, 0.0
    %v1579 = vadd.f32 %v1562, 0.0
    %v1580 = vld [vmem:[#allocation2 + $0x108] sm:$0xff]
    %v1581 = vld [vmem:[#allocation2 + $0x150] sm:$0xff]
    %v1584 = vrot.slane %v1470, 7
    %v1585 = vrot.slane %v1471, 7
    %v1586 = vsel %vm817, %v1584, %v1585
    %v1590 = vmul.f32 %v1461, %v1584
    %v1591 = vmul.f32 %v1462, %v1586
    %v1592 = vmul.f32 %v1463, %v1585
    %v1593 = vsub.f32 %v1590, %v1538
    %v1594 = vsub.f32 %v1591, %v1539
    %v1595 = vsub.f32 %v1592, %v1540
    %v1596 = vmul.f32 %v1593, 1.442695
    %v1597 = vpow.pop %v1596
    %v1598 = vmul.f32 %v1594, 1.442695
    %v1599 = vpow.pop %v1598
    %v1600 = vmul.f32 %v1595, 1.442695
    %v1601 = vpow.pop %v1600
    %v1604 = vrot.slane %v1580, 7
    %v1605 = vrot.slane %v1581, 7
    %v1606 = vsel %vm817, %v1604, %v1605
    %v1610 = vmul.f32 %v1597, %v1604
    %v1611 = vmul.f32 %v1599, %v1606
    %v1612 = vmul.f32 %v1601, %v1605
    %v1613 = vadd.f32 %v1574, %v1610
    %v1614 = vadd.f32 %v1575, %v1611
    %v1615 = vadd.f32 %v1576, %v1612
    %v1616 = vadd.f32 %v1577, %v1597
    %v1617 = vadd.f32 %v1578, %v1599
    %v1618 = vadd.f32 %v1579, %v1601
    %v1619 = vld [vmem:[#allocation2 + $0x110] sm:$0xff]
    %v1620 = vld [vmem:[#allocation2 + $0x158] sm:$0xff]
    %v1623 = vrot.slane %v1479, 7
    %v1624 = vrot.slane %v1480, 7
    %v1625 = vsel %vm817, %v1623, %v1624
    %v1629 = vmul.f32 %v1461, %v1623
    %v1630 = vmul.f32 %v1462, %v1625
    %v1631 = vmul.f32 %v1463, %v1624
    %v1632 = vsub.f32 %v1629, %v1538
    %v1633 = vsub.f32 %v1630, %v1539
    %v1634 = vsub.f32 %v1631, %v1540
    %v1635 = vmul.f32 %v1632, 1.442695
    %v1636 = vpow.pop %v1635
    %v1637 = vmul.f32 %v1633, 1.442695
    %v1638 = vpow.pop %v1637
    %v1639 = vmul.f32 %v1634, 1.442695
    %v1640 = vpow.pop %v1639
    %v1643 = vrot.slane %v1619, 7
    %v1644 = vrot.slane %v1620, 7
    %v1645 = vsel %vm817, %v1643, %v1644
    %v1649 = vmul.f32 %v1636, %v1643
    %v1650 = vmul.f32 %v1638, %v1645
    %v1651 = vmul.f32 %v1640, %v1644
    %v1652 = vadd.f32 %v1613, %v1649
    %v1653 = vadd.f32 %v1614, %v1650
    %v1654 = vadd.f32 %v1615, %v1651
    %v1655 = vadd.f32 %v1616, %v1636
    %v1656 = vadd.f32 %v1617, %v1638
    %v1657 = vadd.f32 %v1618, %v1640
    %v1658 = vld [vmem:[#allocation2 + $0x118] sm:$0xff]
    %v1659 = vld [vmem:[#allocation2 + $0x160] sm:$0xff]
    %v1662 = vrot.slane %v1488, 7
    %v1663 = vrot.slane %v1489, 7
    %v1664 = vsel %vm817, %v1662, %v1663
    %v1668 = vmul.f32 %v1461, %v1662
    %v1669 = vmul.f32 %v1462, %v1664
    %v1670 = vmul.f32 %v1463, %v1663
    %v1671 = vsub.f32 %v1668, %v1538
    %v1672 = vsub.f32 %v1669, %v1539
    %v1673 = vsub.f32 %v1670, %v1540
    %v1674 = vmul.f32 %v1671, 1.442695
    %v1675 = vpow.pop %v1674
    %v1676 = vmul.f32 %v1672, 1.442695
    %v1677 = vpow.pop %v1676
    %v1678 = vmul.f32 %v1673, 1.442695
    %v1679 = vpow.pop %v1678
    %v1682 = vrot.slane %v1658, 7
    %v1683 = vrot.slane %v1659, 7
    %v1684 = vsel %vm817, %v1682, %v1683
    %v1688 = vmul.f32 %v1675, %v1682
    %v1689 = vmul.f32 %v1677, %v1684
    %v1690 = vmul.f32 %v1679, %v1683
    %v1691 = vadd.f32 %v1652, %v1688
    %v1692 = vadd.f32 %v1653, %v1689
    %v1693 = vadd.f32 %v1654, %v1690
    %v1694 = vadd.f32 %v1655, %v1675
    %v1695 = vadd.f32 %v1656, %v1677
    %v1696 = vadd.f32 %v1657, %v1679
    %v1697 = vld [vmem:[#allocation2 + $0xe0] sm:$0xfe]
    %v1698 = vld [vmem:[#allocation2 + $0x170] sm:$0x1]
    %v1699 = vld [vmem:[#allocation2 + $0x100] sm:$0xfe]
    %v1700 = vld [vmem:[#allocation2 + $0x190] sm:$0x1]
    %v1701 = vmul.f32 %v1461, %v1697
    %v1702 = vmul.f32 %v1462, %v1465
    %v1703 = vmul.f32 %v1463, %v1698
    %v1704 = vsub.f32 %v1701, %v1538
    %v1705 = vsub.f32 %v1702, %v1539
    %v1706 = vsub.f32 %v1703, %v1540
    %v1707 = vmul.f32 %v1704, 1.442695
    %v1708 = vpow.pop %v1707
    %v1709 = vmul.f32 %v1705, 1.442695
    %v1710 = vpow.pop %v1709
    %v1711 = vmul.f32 %v1706, 1.442695
    %v1712 = vpow.pop %v1711
    %v1713 = vmul.f32 %v1708, %v1699
    %v1714 = vmul.f32 %v1710, %v1542
    %v1715 = vmul.f32 %v1712, %v1700
    %v1716 = vadd.f32 %v1691, %v1713
    %v1717 = vadd.f32 %v1692, %v1714
    %v1718 = vadd.f32 %v1693, %v1715
    %v1719 = vadd.f32 %v1694, %v1708
    %v1720 = vadd.f32 %v1695, %v1710
    %v1721 = vadd.f32 %v1696, %v1712
    %v1722 = vld [vmem:[#allocation2 + $0xe8] sm:$0xfe]
    %v1723 = vld [vmem:[#allocation2 + $0x178] sm:$0x1]
    %v1724 = vld [vmem:[#allocation2 + $0x108] sm:$0xfe]
    %v1725 = vld [vmem:[#allocation2 + $0x198] sm:$0x1]
    %v1726 = vmul.f32 %v1461, %v1722
    %v1727 = vmul.f32 %v1462, %v1471
    %v1728 = vmul.f32 %v1463, %v1723
    %v1729 = vsub.f32 %v1726, %v1538
    %v1730 = vsub.f32 %v1727, %v1539
    %v1731 = vsub.f32 %v1728, %v1540
    %v1732 = vmul.f32 %v1729, 1.442695
    %v1733 = vpow.pop %v1732
    %v1734 = vmul.f32 %v1730, 1.442695
    %v1735 = vpow.pop %v1734
    %v1736 = vmul.f32 %v1731, 1.442695
    %v1737 = vpow.pop %v1736
    %v1738 = vmul.f32 %v1733, %v1724
    %v1739 = vmul.f32 %v1735, %v1581
    %v1740 = vmul.f32 %v1737, %v1725
    %v1741 = vadd.f32 %v1716, %v1738
    %v1742 = vadd.f32 %v1717, %v1739
    %v1743 = vadd.f32 %v1718, %v1740
    %v1744 = vadd.f32 %v1719, %v1733
    %v1745 = vadd.f32 %v1720, %v1735
    %v1746 = vadd.f32 %v1721, %v1737
    %v1747 = vld [vmem:[#allocation2 + $0xf0] sm:$0xfe]
    %v1748 = vld [vmem:[#allocation2 + $0x180] sm:$0x1]
    %v1749 = vld [vmem:[#allocation2 + $0x110] sm:$0xfe]
    %v1750 = vld [vmem:[#allocation2 + $0x1a0] sm:$0x1]
    %v1751 = vmul.f32 %v1461, %v1747
    %v1752 = vmul.f32 %v1462, %v1480
    %v1753 = vmul.f32 %v1463, %v1748
    %v1754 = vsub.f32 %v1751, %v1538
    %v1755 = vsub.f32 %v1752, %v1539
    %v1756 = vsub.f32 %v1753, %v1540
    %v1757 = vmul.f32 %v1754, 1.442695
    %v1758 = vpow.pop %v1757
    %v1759 = vmul.f32 %v1755, 1.442695
    %v1760 = vpow.pop %v1759
    %v1761 = vmul.f32 %v1756, 1.442695
    %v1762 = vpow.pop %v1761
    %v1763 = vmul.f32 %v1758, %v1749
    %v1764 = vmul.f32 %v1760, %v1620
    %v1765 = vmul.f32 %v1762, %v1750
    %v1766 = vadd.f32 %v1741, %v1763
    %v1767 = vadd.f32 %v1742, %v1764
    %v1768 = vadd.f32 %v1743, %v1765
    %v1769 = vadd.f32 %v1744, %v1758
    %v1770 = vadd.f32 %v1745, %v1760
    %v1771 = vadd.f32 %v1746, %v1762
    %v1772 = vld [vmem:[#allocation2 + $0xf8] sm:$0xfe]
    %v1773 = vld [vmem:[#allocation2 + $0x188] sm:$0x1]
    %v1774 = vld [vmem:[#allocation2 + $0x118] sm:$0xfe]
    %v1775 = vld [vmem:[#allocation2 + $0x160] sm:$0xff]
    %v1776 = vld [vmem:[#allocation2 + $0x1a8] sm:$0x1]
    %v1777 = vmul.f32 %v1461, %v1772
    %v1778 = vmul.f32 %v1462, %v1489
    %v1779 = vmul.f32 %v1463, %v1773
    %v1780 = vsub.f32 %v1777, %v1538
    %v1781 = vsub.f32 %v1778, %v1539
    %v1782 = vsub.f32 %v1779, %v1540
    %v1783 = vmul.f32 %v1780, 1.442695
    %v1784 = vpow.pop %v1783
    %v1785 = vmul.f32 %v1781, 1.442695
    %v1786 = vpow.pop %v1785
    %v1787 = vmul.f32 %v1782, 1.442695
    %v1788 = vpow.pop %v1787
    %v1789 = vmul.f32 %v1784, %v1774
    %v1790 = vmul.f32 %v1786, %v1775
    %v1791 = vmul.f32 %v1788, %v1776
    %v1792 = vadd.f32 %v1766, %v1789
    %v1793 = vadd.f32 %v1767, %v1790
    %v1794 = vadd.f32 %v1768, %v1791
    %v1795 = vadd.f32 %v1769, %v1784
    %v1796 = vadd.f32 %v1770, %v1786
    %v1797 = vadd.f32 %v1771, %v1788
    %v1798 = vld [vmem:[#allocation2 + $0xe0] sm:$0xfc]
    %v1799 = vld [vmem:[#allocation2 + $0x170] sm:$0x3]
    %v1800 = vld [vmem:[#allocation2 + $0x100] sm:$0xfc]
    %v1801 = vld [vmem:[#allocation2 + $0x190] sm:$0x3]
    %v1804 = vrot.slane %v1798, 1
    %v1805 = vrot.slane %v1465, 1
    %v1806 = vsel %vm782, %v1804, %v1805
    %v1807 = vrot.slane %v1799, 1
    %v1808 = vsel %vm782, %v1805, %v1807
    %v1812 = vmul.f32 %v1461, %v1806
    %v1813 = vmul.f32 %v1462, %v1808
    %v1814 = vmul.f32 %v1463, %v1807
    %v1815 = vsub.f32 %v1812, %v1538
    %v1816 = vsub.f32 %v1813, %v1539
    %v1817 = vsub.f32 %v1814, %v1540
    %v1818 = vmul.f32 %v1815, 1.442695
    %v1819 = vpow.pop %v1818
    %v1820 = vmul.f32 %v1816, 1.442695
    %v1821 = vpow.pop %v1820
    %v1822 = vmul.f32 %v1817, 1.442695
    %v1823 = vpow.pop %v1822
    %v1826 = vrot.slane %v1800, 1
    %v1827 = vrot.slane %v1542, 1
    %v1828 = vsel %vm782, %v1826, %v1827
    %v1829 = vrot.slane %v1801, 1
    %v1830 = vsel %vm782, %v1827, %v1829
    %v1834 = vmul.f32 %v1819, %v1828
    %v1835 = vmul.f32 %v1821, %v1830
    %v1836 = vmul.f32 %v1823, %v1829
    %v1837 = vadd.f32 %v1792, %v1834
    %v1838 = vadd.f32 %v1793, %v1835
    %v1839 = vadd.f32 %v1794, %v1836
    %v1840 = vadd.f32 %v1795, %v1819
    %v1841 = vadd.f32 %v1796, %v1821
    %v1842 = vadd.f32 %v1797, %v1823
    %v1843 = vld [vmem:[#allocation2 + $0xe8] sm:$0xfc]
    %v1844 = vld [vmem:[#allocation2 + $0x178] sm:$0x3]
    %v1845 = vld [vmem:[#allocation2 + $0x108] sm:$0xfc]
    %v1846 = vld [vmem:[#allocation2 + $0x198] sm:$0x3]
    %v1849 = vrot.slane %v1843, 1
    %v1850 = vrot.slane %v1471, 1
    %v1851 = vsel %vm782, %v1849, %v1850
    %v1852 = vrot.slane %v1844, 1
    %v1853 = vsel %vm782, %v1850, %v1852
    %v1857 = vmul.f32 %v1461, %v1851
    %v1858 = vmul.f32 %v1462, %v1853
    %v1859 = vmul.f32 %v1463, %v1852
    %v1860 = vsub.f32 %v1857, %v1538
    %v1861 = vsub.f32 %v1858, %v1539
    %v1862 = vsub.f32 %v1859, %v1540
    %v1863 = vmul.f32 %v1860, 1.442695
    %v1864 = vpow.pop %v1863
    %v1865 = vmul.f32 %v1861, 1.442695
    %v1866 = vpow.pop %v1865
    %v1867 = vmul.f32 %v1862, 1.442695
    %v1868 = vpow.pop %v1867
    %v1871 = vrot.slane %v1845, 1
    %v1872 = vrot.slane %v1581, 1
    %v1873 = vsel %vm782, %v1871, %v1872
    %v1874 = vrot.slane %v1846, 1
    %v1875 = vsel %vm782, %v1872, %v1874
    %v1879 = vmul.f32 %v1864, %v1873
    %v1880 = vmul.f32 %v1866, %v1875
    %v1881 = vmul.f32 %v1868, %v1874
    %v1882 = vadd.f32 %v1837, %v1879
    %v1883 = vadd.f32 %v1838, %v1880
    %v1884 = vadd.f32 %v1839, %v1881
    %v1885 = vadd.f32 %v1840, %v1864
    %v1886 = vadd.f32 %v1841, %v1866
    %v1887 = vadd.f32 %v1842, %v1868
    %v1888 = vld [vmem:[#allocation2 + $0xf0] sm:$0xfc]
    %v1889 = vld [vmem:[#allocation2 + $0x180] sm:$0x3]
    %v1890 = vld [vmem:[#allocation2 + $0x110] sm:$0xfc]
    %v1891 = vld [vmem:[#allocation2 + $0x1a0] sm:$0x3]
    %v1894 = vrot.slane %v1888, 1
    %v1895 = vrot.slane %v1480, 1
    %v1896 = vsel %vm782, %v1894, %v1895
    %v1897 = vrot.slane %v1889, 1
    %v1898 = vsel %vm782, %v1895, %v1897
    %v1902 = vmul.f32 %v1461, %v1896
    %v1903 = vmul.f32 %v1462, %v1898
    %v1904 = vmul.f32 %v1463, %v1897
    %v1905 = vsub.f32 %v1902, %v1538
    %v1906 = vsub.f32 %v1903, %v1539
    %v1907 = vsub.f32 %v1904, %v1540
    %v1908 = vmul.f32 %v1905, 1.442695
    %v1909 = vpow.pop %v1908
    %v1910 = vmul.f32 %v1906, 1.442695
    %v1911 = vpow.pop %v1910
    %v1912 = vmul.f32 %v1907, 1.442695
    %v1913 = vpow.pop %v1912
    %v1916 = vrot.slane %v1890, 1
    %v1917 = vrot.slane %v1620, 1
    %v1918 = vsel %vm782, %v1916, %v1917
    %v1919 = vrot.slane %v1891, 1
    %v1920 = vsel %vm782, %v1917, %v1919
    %v1924 = vmul.f32 %v1909, %v1918
    %v1925 = vmul.f32 %v1911, %v1920
    %v1926 = vmul.f32 %v1913, %v1919
    %v1927 = vadd.f32 %v1882, %v1924
    %v1928 = vadd.f32 %v1883, %v1925
    %v1929 = vadd.f32 %v1884, %v1926
    %v1930 = vadd.f32 %v1885, %v1909
    %v1931 = vadd.f32 %v1886, %v1911
    %v1932 = vadd.f32 %v1887, %v1913
    %v1933 = vld [vmem:[#allocation2 + $0xf8] sm:$0xfc]
    %v1934 = vld [vmem:[#allocation2 + $0x188] sm:$0x3]
    %v1935 = vld [vmem:[#allocation2 + $0x118] sm:$0xfc]
    %v1936 = vld [vmem:[#allocation2 + $0x1a8] sm:$0x3]
    %v1939 = vrot.slane %v1933, 1
    %v1940 = vrot.slane %v1489, 1
    %v1941 = vsel %vm782, %v1939, %v1940
    %v1942 = vrot.slane %v1934, 1
    %v1943 = vsel %vm782, %v1940, %v1942
    %v1947 = vmul.f32 %v1461, %v1941
    %v1948 = vmul.f32 %v1462, %v1943
    %v1949 = vmul.f32 %v1463, %v1942
    %v1950 = vsub.f32 %v1947, %v1538
    %v1951 = vsub.f32 %v1948, %v1539
    %v1952 = vsub.f32 %v1949, %v1540
    %v1953 = vmul.f32 %v1950, 1.442695
    %v1954 = vpow.pop %v1953
    %v1955 = vmul.f32 %v1951, 1.442695
    %v1956 = vpow.pop %v1955
    %v1957 = vmul.f32 %v1952, 1.442695
    %v1958 = vpow.pop %v1957
    %v1962 = vrot.slane %v1935, 1
    %v1963 = vrot.slane %v1775, 1
    %v1964 = vsel %vm782, %v1962, %v1963
    %v1965 = vrot.slane %v1936, 1
    %v1966 = vsel %vm782, %v1963, %v1965
    %v1970 = vmul.f32 %v1954, %v1964
    %v1971 = vmul.f32 %v1956, %v1966
    %v1972 = vmul.f32 %v1958, %v1965
    %v1973 = vadd.f32 %v1927, %v1970
    %v1974 = vadd.f32 %v1928, %v1971
    %v1975 = vadd.f32 %v1929, %v1972
    %v1976 = vadd.f32 %v1930, %v1954
    %v1977 = vadd.f32 %v1931, %v1956
    %v1978 = vadd.f32 %v1932, %v1958
    %v1979 = vld [vmem:[#allocation2 + $0xe0] sm:$0xf8]
    %v1980 = vld [vmem:[#allocation2 + $0x170] sm:$0x7]
    %v1981 = vld [vmem:[#allocation2 + $0x100] sm:$0xf8]
    %v1982 = vld [vmem:[#allocation2 + $0x190] sm:$0x7]
    %v1985 = vrot.slane %v1979, 2
    %v1986 = vrot.slane %v1465, 2
    %v1987 = vsel %vm792, %v1985, %v1986
    %v1988 = vrot.slane %v1980, 2
    %v1989 = vsel %vm792, %v1986, %v1988
    %v1993 = vmul.f32 %v1461, %v1987
    %v1994 = vmul.f32 %v1462, %v1989
    %v1995 = vmul.f32 %v1463, %v1988
    %v1996 = vsub.f32 %v1993, %v1538
    %v1997 = vsub.f32 %v1994, %v1539
    %v1998 = vsub.f32 %v1995, %v1540
    %v1999 = vmul.f32 %v1996, 1.442695
    %v2000 = vpow.pop %v1999
    %v2001 = vmul.f32 %v1997, 1.442695
    %v2002 = vpow.pop %v2001
    %v2003 = vmul.f32 %v1998, 1.442695
    %v2004 = vpow.pop %v2003
    %v2007 = vrot.slane %v1981, 2
    %v2008 = vrot.slane %v1542, 2
    %v2009 = vsel %vm792, %v2007, %v2008
    %v2010 = vrot.slane %v1982, 2
    %v2011 = vsel %vm792, %v2008, %v2010
    %v2015 = vmul.f32 %v2000, %v2009
    %v2016 = vmul.f32 %v2002, %v2011
    %v2017 = vmul.f32 %v2004, %v2010
    %v2018 = vadd.f32 %v1973, %v2015
    %v2019 = vadd.f32 %v1974, %v2016
    %v2020 = vadd.f32 %v1975, %v2017
    %v2021 = vadd.f32 %v1976, %v2000
    %v2022 = vadd.f32 %v1977, %v2002
    %v2023 = vadd.f32 %v1978, %v2004
    %v2024 = vld [vmem:[#allocation2 + $0xe8] sm:$0xf8]
    %v2025 = vld [vmem:[#allocation2 + $0x178] sm:$0x7]
    %v2026 = vld [vmem:[#allocation2 + $0x108] sm:$0xf8]
    %v2027 = vld [vmem:[#allocation2 + $0x198] sm:$0x7]
    %v2030 = vrot.slane %v2024, 2
    %v2031 = vrot.slane %v1471, 2
    %v2032 = vsel %vm792, %v2030, %v2031
    %v2033 = vrot.slane %v2025, 2
    %v2034 = vsel %vm792, %v2031, %v2033
    %v2038 = vmul.f32 %v1461, %v2032
    %v2039 = vmul.f32 %v1462, %v2034
    %v2040 = vmul.f32 %v1463, %v2033
    %v2041 = vsub.f32 %v2038, %v1538
    %v2042 = vsub.f32 %v2039, %v1539
    %v2043 = vsub.f32 %v2040, %v1540
    %v2044 = vmul.f32 %v2041, 1.442695
    %v2045 = vpow.pop %v2044
    %v2046 = vmul.f32 %v2042, 1.442695
    %v2047 = vpow.pop %v2046
    %v2048 = vmul.f32 %v2043, 1.442695
    %v2049 = vpow.pop %v2048
    %v2052 = vrot.slane %v2026, 2
    %v2053 = vrot.slane %v1581, 2
    %v2054 = vsel %vm792, %v2052, %v2053
    %v2055 = vrot.slane %v2027, 2
    %v2056 = vsel %vm792, %v2053, %v2055
    %v2060 = vmul.f32 %v2045, %v2054
    %v2061 = vmul.f32 %v2047, %v2056
    %v2062 = vmul.f32 %v2049, %v2055
    %v2063 = vadd.f32 %v2018, %v2060
    %v2064 = vadd.f32 %v2019, %v2061
    %v2065 = vadd.f32 %v2020, %v2062
    %v2066 = vadd.f32 %v2021, %v2045
    %v2067 = vadd.f32 %v2022, %v2047
    %v2068 = vadd.f32 %v2023, %v2049
    %v2069 = vld [vmem:[#allocation2 + $0xf0] sm:$0xf8]
    %v2070 = vld [vmem:[#allocation2 + $0x180] sm:$0x7]
    %v2071 = vld [vmem:[#allocation2 + $0x110] sm:$0xf8]
    %v2072 = vld [vmem:[#allocation2 + $0x1a0] sm:$0x7]
    %v2075 = vrot.slane %v2069, 2
    %v2076 = vrot.slane %v1480, 2
    %v2077 = vsel %vm792, %v2075, %v2076
    %v2078 = vrot.slane %v2070, 2
    %v2079 = vsel %vm792, %v2076, %v2078
    %v2083 = vmul.f32 %v1461, %v2077
    %v2084 = vmul.f32 %v1462, %v2079
    %v2085 = vmul.f32 %v1463, %v2078
    %v2086 = vsub.f32 %v2083, %v1538
    %v2087 = vsub.f32 %v2084, %v1539
    %v2088 = vsub.f32 %v2085, %v1540
    %v2089 = vmul.f32 %v2086, 1.442695
    %v2090 = vpow.pop %v2089
    %v2091 = vmul.f32 %v2087, 1.442695
    %v2092 = vpow.pop %v2091
    %v2093 = vmul.f32 %v2088, 1.442695
    %v2094 = vpow.pop %v2093
    %v2097 = vrot.slane %v2071, 2
    %v2098 = vrot.slane %v1620, 2
    %v2099 = vsel %vm792, %v2097, %v2098
    %v2100 = vrot.slane %v2072, 2
    %v2101 = vsel %vm792, %v2098, %v2100
    %v2105 = vmul.f32 %v2090, %v2099
    %v2106 = vmul.f32 %v2092, %v2101
    %v2107 = vmul.f32 %v2094, %v2100
    %v2108 = vadd.f32 %v2063, %v2105
    %v2109 = vadd.f32 %v2064, %v2106
    %v2110 = vadd.f32 %v2065, %v2107
    %v2111 = vadd.f32 %v2066, %v2090
    %v2112 = vadd.f32 %v2067, %v2092
    %v2113 = vadd.f32 %v2068, %v2094
    %v2114 = vld [vmem:[#allocation2 + $0xf8] sm:$0xf8]
    %v2115 = vld [vmem:[#allocation2 + $0x188] sm:$0x7]
    %v2116 = vld [vmem:[#allocation2 + $0x118] sm:$0xf8]
    %v2117 = vld [vmem:[#allocation2 + $0x1a8] sm:$0x7]
    %v2120 = vrot.slane %v2114, 2
    %v2121 = vrot.slane %v1489, 2
    %v2122 = vsel %vm792, %v2120, %v2121
    %v2123 = vrot.slane %v2115, 2
    %v2124 = vsel %vm792, %v2121, %v2123
    %v2128 = vmul.f32 %v1461, %v2122
    %v2129 = vmul.f32 %v1462, %v2124
    %v2130 = vmul.f32 %v1463, %v2123
    %v2131 = vsub.f32 %v2128, %v1538
    %v2132 = vsub.f32 %v2129, %v1539
    %v2133 = vsub.f32 %v2130, %v1540
    %v2134 = vmul.f32 %v2131, 1.442695
    %v2135 = vpow.pop %v2134
    %v2136 = vmul.f32 %v2132, 1.442695
    %v2137 = vpow.pop %v2136
    %v2138 = vmul.f32 %v2133, 1.442695
    %v2139 = vpow.pop %v2138
    %v2142 = vrot.slane %v2116, 2
    %v2143 = vrot.slane %v1775, 2
    %v2144 = vsel %vm792, %v2142, %v2143
    %v2145 = vrot.slane %v2117, 2
    %v2146 = vsel %vm792, %v2143, %v2145
    %v2150 = vmul.f32 %v2135, %v2144
    %v2151 = vmul.f32 %v2137, %v2146
    %v2152 = vmul.f32 %v2139, %v2145
    %v2153 = vadd.f32 %v2108, %v2150
    %v2154 = vadd.f32 %v2109, %v2151
    %v2155 = vadd.f32 %v2110, %v2152
    %v2156 = vadd.f32 %v2111, %v2135
    %v2157 = vadd.f32 %v2112, %v2137
    %v2158 = vadd.f32 %v2113, %v2139
    %v2159 = vrcp.pop %v2156
    %v2160 = vrcp.pop %v2157
    %v2161 = vrcp.pop %v2158
    %v2162 = vmul.f32 %v2156, %v2159
    %v2163 = vmul.f32 %v2157, %v2160
    %v2164 = vmul.f32 %v2158, %v2161
    %v2165 = vsub.f32 2.0, %v2162
    %v2166 = vsub.f32 2.0, %v2163
    %v2167 = vsub.f32 2.0, %v2164
    %v2168 = vmul.f32 %v2159, %v2165
    %v2169 = vmul.f32 %v2160, %v2166
    %v2170 = vmul.f32 %v2161, %v2167
    %v2171 = vmul.f32 %v2153, %v2168
    %v2172 = vmul.f32 %v2154, %v2169
    %v2173 = vmul.f32 %v2155, %v2170
    %s2174 = scalar_lea.vmem [#allocation8], 16
    %2175 = vst [vmem:[%s2174 - $0x1] sm:$0xfe] %v2171
    %2176 = vst [vmem:[%s2174 + $0x7] sm:$0xff] %v2172
    %2177 = vst [vmem:[%s2174 + $0xf] sm:$0x1] %v2173
    // Predicated region
    $region18: #{tpu_custom_call.1} parent=1 // pred_check
      _
    $region19: #{tpu_custom_call.1} parent=1 // pred_check_branch
      %2179 = sbr.rel (0) target = $region21
    $region20: #{tpu_custom_call.1} parent=1 // pred_region
      %s2181 = ssub.s32 512, 512
      %2182 = vsyncadd [#allocation5], %s2181
      %s2183 = sshll.u32 [#allocation8], 4
      %s2184 = int_to_ptr.vmem [resolvable:$true] %s2183
      %2189 = dma.vmem_to_hbm [thread:$0]  %s2184, 512, %s2, [#allocation5], 128, 128, 8
    $region21: #{tpu_custom_call.1} parent=1 // pred_fallthru
      _
    // Predicated region
    $region22: #{tpu_custom_call.1} parent=1 // pred_check
      _
    $region23: #{tpu_custom_call.1} parent=1 // pred_check_branch
      %2191 = sbr.rel (0) target = $region25
    $region24: #{tpu_custom_call.1} parent=1 // pred_region
      %2192 = dma.done [#allocation5], 512
    $region25: #{tpu_custom_call.1} parent=1 // pred_fallthru
      _
    %2193 = vsyncpa [#allocation4], 1
    %2194 = vsyncpa [#allocation7], 1
    %2195 = vsyncpa [#allocation5], 1

</llo_original>
